<compile_context>
chip_gen: v6e
topology: v6e:2x2x1
jax: 0.10.0
libtpu: 0.0.40
codegen_flags: <defaults>
</compile_context>

<pallas_src>
from functools import partial

import jax
import jax.numpy as jnp
from jax.experimental import pallas as pl
from jax.experimental.pallas import tpu as pltpu


def _lse(x, axis):
    m = jnp.max(x, axis=axis, keepdims=True)
    return m + jnp.log(jnp.sum(jnp.exp(x - m), axis=axis, keepdims=True))


# ---------------------------------------------------------------------------
# Fused kernel: Gumbel-Sinkhorn perm + sort + per-block attention + un-permute
# ---------------------------------------------------------------------------
def sparse_attention_kernel(q_ref, k_ref, v_ref, u_ref, o_ref, *,
                            blocks, temperature, n_iters):
    C = q_ref.shape[1]
    H = q_ref.shape[2]
    Hb = H // blocks
    Wb = blocks - 1
    inv_t = 1.0 / temperature

    # Per-block (C, Hb) tiles -- static lane slices of the (C, H) VMEM tile.
    q_blk = [q_ref[0, :, w * Hb:(w + 1) * Hb] for w in range(Wb)]
    k_blk = [k_ref[0, :, w * Hb:(w + 1) * Hb] for w in range(Wb)]
    v_blk = [v_ref[0, :, w * Hb:(w + 1) * Hb] for w in range(Wb)]

    # --- AttentionPermMatrix: channel means -> R -> Gumbel -> Sinkhorn -------
    # sq[w, h] = mean_c q_block_w[c, h]; rows assembled with iota masks (no
    # lane->sublane reshape, no sublane concat).
    rid = jax.lax.broadcasted_iota(jnp.int32, (Wb, Hb), 0)
    sq = jnp.zeros((Wb, Hb), jnp.float32)
    sk = jnp.zeros((Wb, Hb), jnp.float32)
    for w in range(Wb):
        mq = jnp.mean(q_blk[w], axis=0, keepdims=True)           # (1, Hb)
        mk = jnp.mean(k_blk[w], axis=0, keepdims=True)
        sq = jnp.where(rid == w, jnp.broadcast_to(mq, (Wb, Hb)), sq)
        sk = jnp.where(rid == w, jnp.broadcast_to(mk, (Wb, Hb)), sk)

    R = jax.lax.dot_general(sq, sk, (((1,), (1,)), ((), ())),
                            preferred_element_type=jnp.float32)
    R = R * (C ** -0.5)
    r = jnp.log(jnp.maximum(R, 0.0))           # log(relu(R)) as in the module
    u = u_ref[0]                               # uniform(0,1) noise
    g = -jnp.log(-jnp.log(u + 1e-6) + 1e-6)    # Gumbel
    r = (r + g) * inv_t
    for _ in range(n_iters):                   # log-domain Sinkhorn (f32)
        r = r - _lse(r, 1)                     # torch dim=2
        r = r - _lse(r, 0)                     # torch dim=1
    perm = jnp.exp(r)                          # (Wb, Wb)

    # --- sort K/V (weighted block combination) + per-block attention ---------
    vals = []
    for w in range(Wb):
        # ks[c, j] = sum_u perm[u, w] * k_block_u[c, j]  ( == k_sort[c, j, w] )
        ks = k_blk[0] * perm[0:1, w:w + 1]
        vs = v_blk[0] * perm[0:1, w:w + 1]
        for uu in range(1, Wb):
            ks = ks + k_blk[uu] * perm[uu:uu + 1, w:w + 1]
            vs = vs + v_blk[uu] * perm[uu:uu + 1, w:w + 1]
        # logits[i, j] = sum_c q_w[c, i] * ks[c, j] / T   (bf16 MXU, f32 acc)
        logits = jax.lax.dot_general(
            q_blk[w].astype(jnp.bfloat16), ks.astype(jnp.bfloat16),
            (((0,), (0,)), ((), ())),
            preferred_element_type=jnp.float32) * inv_t
        m = jnp.max(logits, axis=-1, keepdims=True)
        e = jnp.exp(logits - m)
        attn = e * pl.reciprocal(jnp.sum(e, axis=-1, keepdims=True), approx=True)
        # val_w[c, i] = sum_j vs[c, j] * attn[i, j]
        val = jax.lax.dot_general(
            vs.astype(jnp.bfloat16), attn.astype(jnp.bfloat16),
            (((1,), (1,)), ((), ())),
            preferred_element_type=jnp.float32)                   # (C, Hb)
        vals.append(val)

    # --- un-permute (org_perm_val) and write the lane-dense (C, H) output ----
    for w in range(Wb):
        opv = vals[0] * perm[w:w + 1, 0:1]
        for j in range(1, Wb):
            opv = opv + vals[j] * perm[w:w + 1, j:j + 1]
        o_ref[0, :, w * Hb:(w + 1) * Hb] = opv
    # last V chunk passes through untouched (b_v_last)
    o_ref[0, :, Wb * Hb:H] = v_ref[0, :, Wb * Hb:H]


# ---------------------------------------------------------------------------
# Wrapper: free reshapes in, one output-side transpose out
# ---------------------------------------------------------------------------
def sparse_attention(q, k, v, u, *, blocks, temperature, sinkhorn_iter):
    B, C, H, W = q.shape
    assert W == 1, "module is used with NCHW, W == 1"
    assert H % blocks == 0
    Wb = blocks - 1

    # free reshapes only (no HBM transpose passes on the inputs)
    q3 = q.reshape(B, C, H)
    k3 = k.reshape(B, C, H)
    v3 = v.reshape(B, C, H)

    out_t = pl.pallas_call(
        partial(sparse_attention_kernel, blocks=blocks,
                temperature=temperature, n_iters=sinkhorn_iter),
        out_shape=jax.ShapeDtypeStruct((B, C, H), jnp.float32),
        grid=(B,),
        in_specs=[
            pl.BlockSpec((1, C, H), lambda b: (b, 0, 0)),
            pl.BlockSpec((1, C, H), lambda b: (b, 0, 0)),
            pl.BlockSpec((1, C, H), lambda b: (b, 0, 0)),
            pl.BlockSpec((1, Wb, Wb), lambda b: (b, 0, 0)),
        ],
        out_specs=pl.BlockSpec((1, C, H), lambda b: (b, 0, 0)),
        compiler_params=pltpu.CompilerParams(
            dimension_semantics=("parallel",),
            vmem_limit_bytes=32 * 1024 * 1024),
    )(q3, k3, v3, u)

    # module output layout: (B, 1, H, C); one output transpose keeps kernel
    # stores lane-dense instead of masked narrow-C stores.
    return out_t.transpose(0, 2, 1)[:, None, :, :]


# ---------------------------------------------------------------------------
# Pure-JAX reference (mirrors SparseAttention.forward exactly, same gumbel noise)
# ---------------------------------------------------------------------------
def reference(q, k, v, u, *, blocks, temperature, sinkhorn_iter):
    hp = jax.lax.Precision.HIGHEST
    B, C, H, W = q.shape
    Hb, Wb = H // blocks, blocks - 1

    def cat_chunks(x):  # torch.cat(x.chunk(blocks, dim=2)[:-1], dim=-1)
        return jnp.concatenate(
            [x[:, :, i * Hb:(i + 1) * Hb, :] for i in range(Wb)], axis=-1)

    b_q, b_k, b_v = cat_chunks(q), cat_chunks(k), cat_chunks(v)   # (B,C,Hb,Wb)

    sq = b_q.mean(axis=1).transpose(0, 2, 1)                      # (B,Wb,Hb)
    sk = b_k.mean(axis=1).transpose(0, 2, 1)
    R = jnp.einsum('bie,bje->bij', sq, sk, precision=hp) * (C ** -0.5)
    r = jnp.log(jnp.maximum(R, 0.0))
    g = -jnp.log(-jnp.log(u + 1e-6) + 1e-6)
    r = (r + g) / temperature
    for _ in range(sinkhorn_iter):
        r = r - _lse(r, 2)
        r = r - _lse(r, 1)
    perm = jnp.exp(r)                                             # (B,Wb,Wb)
    perm4 = jnp.broadcast_to(perm[:, None], (B, C, Wb, Wb))

    k_sort = jnp.matmul(b_k, perm4, precision=hp)                 # (B,C,Hb,Wb)
    v_sort = jnp.matmul(b_v, perm4, precision=hp)

    b_q_t = b_q.transpose(0, 3, 2, 1)                             # (B,Wb,Hb,C)
    b_k_s = k_sort.transpose(0, 3, 2, 1)
    b_v_s = v_sort.transpose(0, 3, 2, 1)

    logits = jnp.matmul(b_q_t, b_k_s.transpose(0, 1, 3, 2), precision=hp) / temperature
    attn = jax.nn.softmax(logits, axis=-1)
    value = jnp.matmul(attn, b_v_s, precision=hp)                 # (B,Wb,Hb,C)

    org_perm_val = jnp.matmul(perm4, value.transpose(0, 3, 1, 2),
                              precision=hp).transpose(0, 2, 3, 1)  # (B,Wb,Hb,C)

    # torch.cat(org_perm_val.chunk(blocks, dim=1), dim=2) with W == 1
    main = org_perm_val.reshape(B, 1, Wb * Hb, C)
    b_v_last = v[:, :, Wb * Hb:, :].transpose(0, 3, 2, 1)          # (B,1,Hb,C)
    return jnp.concatenate([main, b_v_last], axis=2)               # (B,1,H,C)


# ---------------------------------------------------------------------------
if __name__ == "__main__":
    B, C, H, W = 2, 4, 16, 1
    blocks, temperature, sinkhorn_iter = 4, 0.7, 8
    Wb = blocks - 1

    key = jax.random.PRNGKey(0)
    kq, kk, kv, ku = jax.random.split(key, 4)
    # Strictly-positive inputs keep relu(R) > 0 so the log-domain Sinkhorn stays
    # finite (the same regime the PyTorch module requires).
    q = jax.random.uniform(kq, (B, C, H, W), dtype=jnp.float32)
    k = jax.random.uniform(kk, (B, C, H, W), dtype=jnp.float32)
    v = jax.random.uniform(kv, (B, C, H, W), dtype=jnp.float32)
    u = jax.random.uniform(ku, (B, Wb, Wb), dtype=jnp.float32)  # gumbel base noise

    out = sparse_attention(q, k, v, u, blocks=blocks, temperature=temperature,
                           sinkhorn_iter=sinkhorn_iter)
    out = jax.block_until_ready(out)

    ref = reference(q, k, v, u, blocks=blocks, temperature=temperature,
                    sinkhorn_iter=sinkhorn_iter)

    assert out.shape == (B, 1, H, C), out.shape
    assert bool(jnp.all(jnp.isfinite(out)))
    # tolerance covers bf16 MXU operands / approx reciprocal in the kernel vs the
    # HIGHEST-precision f32 reference
    err = float(jnp.max(jnp.abs(out - ref)))
    assert bool(jnp.allclose(out, ref, rtol=5e-2, atol=5e-2)), err
    print("KERNEL_OK")
</pallas_src>

<mosaic_0001>
module attributes {stable_mosaic.version = 11 : i64} {
  func.func @sparse_attention_kernel(%arg0: i32, %arg1: memref<1x4x16xf32, #tpu.memory_space<vmem>>, %arg2: memref<1x4x16xf32, #tpu.memory_space<vmem>>, %arg3: memref<1x4x16xf32, #tpu.memory_space<vmem>>, %arg4: memref<1x3x3xf32, #tpu.memory_space<vmem>>, %arg5: memref<1x4x16xf32, #tpu.memory_space<vmem>>) attributes {dimension_semantics = [#tpu.dimension_semantics<parallel>], iteration_bounds = array<i64: 2>, scalar_prefetch = 0 : i64, scratch_operands = 0 : i64, tpu.core_type = #tpu.core_type<tc>, window_params = [{transform_indices = @transform_0, window_bounds = array<i64: 1, 4, 16>}, {transform_indices = @transform_1, window_bounds = array<i64: 1, 4, 16>}, {transform_indices = @transform_2, window_bounds = array<i64: 1, 4, 16>}, {transform_indices = @transform_3, window_bounds = array<i64: 1, 3, 3>}, {transform_indices = @transform_4, window_bounds = array<i64: 1, 4, 16>}]} {
    %c0 = arith.constant 0 : index
    %c0_0 = arith.constant 0 : index
    %c0_1 = arith.constant 0 : index
    %0 = vector.load %arg1[%c0, %c0_0, %c0_1] : memref<1x4x16xf32, #tpu.memory_space<vmem>>, vector<1x4x4xf32>
    %1 = vector.shape_cast %0 : vector<1x4x4xf32> to vector<4x4xf32>
    %c0_2 = arith.constant 0 : index
    %c0_3 = arith.constant 0 : index
    %c4 = arith.constant 4 : index
    %2 = vector.load %arg1[%c0_2, %c0_3, %c4] : memref<1x4x16xf32, #tpu.memory_space<vmem>>, vector<1x4x4xf32>
    %3 = vector.shape_cast %2 : vector<1x4x4xf32> to vector<4x4xf32>
    %c0_4 = arith.constant 0 : index
    %c0_5 = arith.constant 0 : index
    %c8 = arith.constant 8 : index
    %4 = vector.load %arg1[%c0_4, %c0_5, %c8] : memref<1x4x16xf32, #tpu.memory_space<vmem>>, vector<1x4x4xf32>
    %5 = vector.shape_cast %4 : vector<1x4x4xf32> to vector<4x4xf32>
    %c0_6 = arith.constant 0 : index
    %c0_7 = arith.constant 0 : index
    %c0_8 = arith.constant 0 : index
    %6 = vector.load %arg2[%c0_6, %c0_7, %c0_8] : memref<1x4x16xf32, #tpu.memory_space<vmem>>, vector<1x4x4xf32>
    %7 = vector.shape_cast %6 : vector<1x4x4xf32> to vector<4x4xf32>
    %c0_9 = arith.constant 0 : index
    %c0_10 = arith.constant 0 : index
    %c4_11 = arith.constant 4 : index
    %8 = vector.load %arg2[%c0_9, %c0_10, %c4_11] : memref<1x4x16xf32, #tpu.memory_space<vmem>>, vector<1x4x4xf32>
    %9 = vector.shape_cast %8 : vector<1x4x4xf32> to vector<4x4xf32>
    %c0_12 = arith.constant 0 : index
    %c0_13 = arith.constant 0 : index
    %c8_14 = arith.constant 8 : index
    %10 = vector.load %arg2[%c0_12, %c0_13, %c8_14] : memref<1x4x16xf32, #tpu.memory_space<vmem>>, vector<1x4x4xf32>
    %11 = vector.shape_cast %10 : vector<1x4x4xf32> to vector<4x4xf32>
    %c0_15 = arith.constant 0 : index
    %c0_16 = arith.constant 0 : index
    %c0_17 = arith.constant 0 : index
    %12 = vector.load %arg3[%c0_15, %c0_16, %c0_17] : memref<1x4x16xf32, #tpu.memory_space<vmem>>, vector<1x4x4xf32>
    %13 = vector.shape_cast %12 : vector<1x4x4xf32> to vector<4x4xf32>
    %c0_18 = arith.constant 0 : index
    %c0_19 = arith.constant 0 : index
    %c4_20 = arith.constant 4 : index
    %14 = vector.load %arg3[%c0_18, %c0_19, %c4_20] : memref<1x4x16xf32, #tpu.memory_space<vmem>>, vector<1x4x4xf32>
    %15 = vector.shape_cast %14 : vector<1x4x4xf32> to vector<4x4xf32>
    %c0_21 = arith.constant 0 : index
    %c0_22 = arith.constant 0 : index
    %c8_23 = arith.constant 8 : index
    %16 = vector.load %arg3[%c0_21, %c0_22, %c8_23] : memref<1x4x16xf32, #tpu.memory_space<vmem>>, vector<1x4x4xf32>
    %17 = vector.shape_cast %16 : vector<1x4x4xf32> to vector<4x4xf32>
    %18 = tpu.iota {dimensions = array<i32: 0>} : vector<3x4xi32>
    %cst = arith.constant 0.000000e+00 : f32
    %19 = vector.broadcast %cst : f32 to vector<3x4xf32>
    %cst_24 = arith.constant 0.000000e+00 : f32
    %20 = vector.broadcast %cst_24 : f32 to vector<3x4xf32>
    %cst_25 = arith.constant dense<0.000000e+00> : vector<4xf32>
    %21 = vector.multi_reduction <add>, %1, %cst_25 [0] : vector<4x4xf32> to vector<4xf32>
    %22 = vector.shape_cast %21 : vector<4xf32> to vector<1x4xf32>
    %cst_26 = arith.constant 4.000000e+00 : f32
    %23 = vector.broadcast %cst_26 : f32 to vector<1x4xf32>
    %24 = arith.divf %22, %23 : vector<1x4xf32>
    %cst_27 = arith.constant dense<0.000000e+00> : vector<4xf32>
    %25 = vector.multi_reduction <add>, %7, %cst_27 [0] : vector<4x4xf32> to vector<4xf32>
    %26 = vector.shape_cast %25 : vector<4xf32> to vector<1x4xf32>
    %cst_28 = arith.constant 4.000000e+00 : f32
    %27 = vector.broadcast %cst_28 : f32 to vector<1x4xf32>
    %28 = arith.divf %26, %27 : vector<1x4xf32>
    %c0_i32 = arith.constant 0 : i32
    %29 = vector.broadcast %c0_i32 : i32 to vector<3x4xi32>
    %30 = arith.cmpi eq, %18, %29 : vector<3x4xi32>
    %31 = vector.shape_cast %24 : vector<1x4xf32> to vector<1x4xf32>
    %32 = vector.broadcast %31 : vector<1x4xf32> to vector<3x4xf32>
    %33 = arith.select %30, %32, %19 : vector<3x4xi1>, vector<3x4xf32>
    %c0_i32_29 = arith.constant 0 : i32
    %34 = vector.broadcast %c0_i32_29 : i32 to vector<3x4xi32>
    %35 = arith.cmpi eq, %18, %34 : vector<3x4xi32>
    %36 = vector.shape_cast %28 : vector<1x4xf32> to vector<1x4xf32>
    %37 = vector.broadcast %36 : vector<1x4xf32> to vector<3x4xf32>
    %38 = arith.select %35, %37, %20 : vector<3x4xi1>, vector<3x4xf32>
    %cst_30 = arith.constant dense<0.000000e+00> : vector<4xf32>
    %39 = vector.multi_reduction <add>, %3, %cst_30 [0] : vector<4x4xf32> to vector<4xf32>
    %40 = vector.shape_cast %39 : vector<4xf32> to vector<1x4xf32>
    %cst_31 = arith.constant 4.000000e+00 : f32
    %41 = vector.broadcast %cst_31 : f32 to vector<1x4xf32>
    %42 = arith.divf %40, %41 : vector<1x4xf32>
    %cst_32 = arith.constant dense<0.000000e+00> : vector<4xf32>
    %43 = vector.multi_reduction <add>, %9, %cst_32 [0] : vector<4x4xf32> to vector<4xf32>
    %44 = vector.shape_cast %43 : vector<4xf32> to vector<1x4xf32>
    %cst_33 = arith.constant 4.000000e+00 : f32
    %45 = vector.broadcast %cst_33 : f32 to vector<1x4xf32>
    %46 = arith.divf %44, %45 : vector<1x4xf32>
    %c1_i32 = arith.constant 1 : i32
    %47 = vector.broadcast %c1_i32 : i32 to vector<3x4xi32>
    %48 = arith.cmpi eq, %18, %47 : vector<3x4xi32>
    %49 = vector.shape_cast %42 : vector<1x4xf32> to vector<1x4xf32>
    %50 = vector.broadcast %49 : vector<1x4xf32> to vector<3x4xf32>
    %51 = arith.select %48, %50, %33 : vector<3x4xi1>, vector<3x4xf32>
    %c1_i32_34 = arith.constant 1 : i32
    %52 = vector.broadcast %c1_i32_34 : i32 to vector<3x4xi32>
    %53 = arith.cmpi eq, %18, %52 : vector<3x4xi32>
    %54 = vector.shape_cast %46 : vector<1x4xf32> to vector<1x4xf32>
    %55 = vector.broadcast %54 : vector<1x4xf32> to vector<3x4xf32>
    %56 = arith.select %53, %55, %38 : vector<3x4xi1>, vector<3x4xf32>
    %cst_35 = arith.constant dense<0.000000e+00> : vector<4xf32>
    %57 = vector.multi_reduction <add>, %5, %cst_35 [0] : vector<4x4xf32> to vector<4xf32>
    %58 = vector.shape_cast %57 : vector<4xf32> to vector<1x4xf32>
    %cst_36 = arith.constant 4.000000e+00 : f32
    %59 = vector.broadcast %cst_36 : f32 to vector<1x4xf32>
    %60 = arith.divf %58, %59 : vector<1x4xf32>
    %cst_37 = arith.constant dense<0.000000e+00> : vector<4xf32>
    %61 = vector.multi_reduction <add>, %11, %cst_37 [0] : vector<4x4xf32> to vector<4xf32>
    %62 = vector.shape_cast %61 : vector<4xf32> to vector<1x4xf32>
    %cst_38 = arith.constant 4.000000e+00 : f32
    %63 = vector.broadcast %cst_38 : f32 to vector<1x4xf32>
    %64 = arith.divf %62, %63 : vector<1x4xf32>
    %c2_i32 = arith.constant 2 : i32
    %65 = vector.broadcast %c2_i32 : i32 to vector<3x4xi32>
    %66 = arith.cmpi eq, %18, %65 : vector<3x4xi32>
    %67 = vector.shape_cast %60 : vector<1x4xf32> to vector<1x4xf32>
    %68 = vector.broadcast %67 : vector<1x4xf32> to vector<3x4xf32>
    %69 = arith.select %66, %68, %51 : vector<3x4xi1>, vector<3x4xf32>
    %c2_i32_39 = arith.constant 2 : i32
    %70 = vector.broadcast %c2_i32_39 : i32 to vector<3x4xi32>
    %71 = arith.cmpi eq, %18, %70 : vector<3x4xi32>
    %72 = vector.shape_cast %64 : vector<1x4xf32> to vector<1x4xf32>
    %73 = vector.broadcast %72 : vector<1x4xf32> to vector<3x4xf32>
    %74 = arith.select %71, %73, %56 : vector<3x4xi1>, vector<3x4xf32>
    %cst_40 = arith.constant dense<0.000000e+00> : vector<3x3xf32>
    %75 = tpu.matmul %69, %74, %cst_40 {dimension_numbers = #tpu.dot_dimension_numbers<[1], [1], [0], [0], [0, 0, 1, 0], [], []>} : vector<3x4xf32>, vector<3x4xf32>, vector<3x3xf32> -> vector<3x3xf32>
    %cst_41 = arith.constant 5.000000e-01 : f32
    %76 = vector.broadcast %cst_41 : f32 to vector<3x3xf32>
    %77 = arith.mulf %75, %76 : vector<3x3xf32>
    %cst_42 = arith.constant 0.000000e+00 : f32
    %78 = vector.broadcast %cst_42 : f32 to vector<3x3xf32>
    %79 = arith.maximumf %77, %78 : vector<3x3xf32>
    %80 = math.log %79 : vector<3x3xf32>
    %c0_43 = arith.constant 0 : index
    %c0_44 = arith.constant 0 : index
    %c0_45 = arith.constant 0 : index
    %81 = vector.load %arg4[%c0_43, %c0_44, %c0_45] : memref<1x3x3xf32, #tpu.memory_space<vmem>>, vector<1x3x3xf32>
    %82 = vector.shape_cast %81 : vector<1x3x3xf32> to vector<3x3xf32>
    %cst_46 = arith.constant 9.99999997E-7 : f32
    %83 = vector.broadcast %cst_46 : f32 to vector<3x3xf32>
    %84 = arith.addf %82, %83 : vector<3x3xf32>
    %85 = math.log %84 : vector<3x3xf32>
    %cst_47 = arith.constant 0.000000e+00 : f32
    %86 = vector.broadcast %cst_47 : f32 to vector<3x3xf32>
    %87 = arith.subf %86, %85 : vector<3x3xf32>
    %cst_48 = arith.constant 9.99999997E-7 : f32
    %88 = vector.broadcast %cst_48 : f32 to vector<3x3xf32>
    %89 = arith.addf %87, %88 : vector<3x3xf32>
    %90 = math.log %89 : vector<3x3xf32>
    %cst_49 = arith.constant 0.000000e+00 : f32
    %91 = vector.broadcast %cst_49 : f32 to vector<3x3xf32>
    %92 = arith.subf %91, %90 : vector<3x3xf32>
    %93 = arith.addf %80, %92 : vector<3x3xf32>
    %cst_50 = arith.constant 1.42857146 : f32
    %94 = vector.broadcast %cst_50 : f32 to vector<3x3xf32>
    %95 = arith.mulf %93, %94 : vector<3x3xf32>
    %cst_51 = arith.constant dense<0xFF800000> : vector<3xf32>
    %96 = vector.multi_reduction <maximumf>, %95, %cst_51 [1] : vector<3x3xf32> to vector<3xf32>
    %97 = vector.shape_cast %96 : vector<3xf32> to vector<3x1xf32>
    %98 = vector.broadcast %97 : vector<3x1xf32> to vector<3x3xf32>
    %99 = arith.subf %95, %98 : vector<3x3xf32>
    %100 = math.exp %99 : vector<3x3xf32>
    %cst_52 = arith.constant dense<0.000000e+00> : vector<3xf32>
    %101 = vector.multi_reduction <add>, %100, %cst_52 [1] : vector<3x3xf32> to vector<3xf32>
    %102 = vector.shape_cast %101 : vector<3xf32> to vector<3x1xf32>
    %103 = math.log %102 : vector<3x1xf32>
    %104 = arith.addf %97, %103 : vector<3x1xf32>
    %105 = vector.broadcast %104 : vector<3x1xf32> to vector<3x3xf32>
    %106 = arith.subf %95, %105 : vector<3x3xf32>
    %cst_53 = arith.constant dense<0xFF800000> : vector<3xf32>
    %107 = vector.multi_reduction <maximumf>, %106, %cst_53 [0] : vector<3x3xf32> to vector<3xf32>
    %108 = vector.shape_cast %107 : vector<3xf32> to vector<1x3xf32>
    %109 = vector.broadcast %108 : vector<1x3xf32> to vector<3x3xf32>
    %110 = arith.subf %106, %109 : vector<3x3xf32>
    %111 = math.exp %110 : vector<3x3xf32>
    %cst_54 = arith.constant dense<0.000000e+00> : vector<3xf32>
    %112 = vector.multi_reduction <add>, %111, %cst_54 [0] : vector<3x3xf32> to vector<3xf32>
    %113 = vector.shape_cast %112 : vector<3xf32> to vector<1x3xf32>
    %114 = math.log %113 : vector<1x3xf32>
    %115 = arith.addf %108, %114 : vector<1x3xf32>
    %116 = vector.broadcast %115 : vector<1x3xf32> to vector<3x3xf32>
    %117 = arith.subf %106, %116 : vector<3x3xf32>
    %cst_55 = arith.constant dense<0xFF800000> : vector<3xf32>
    %118 = vector.multi_reduction <maximumf>, %117, %cst_55 [1] : vector<3x3xf32> to vector<3xf32>
    %119 = vector.shape_cast %118 : vector<3xf32> to vector<3x1xf32>
    %120 = vector.broadcast %119 : vector<3x1xf32> to vector<3x3xf32>
    %121 = arith.subf %117, %120 : vector<3x3xf32>
    %122 = math.exp %121 : vector<3x3xf32>
    %cst_56 = arith.constant dense<0.000000e+00> : vector<3xf32>
    %123 = vector.multi_reduction <add>, %122, %cst_56 [1] : vector<3x3xf32> to vector<3xf32>
    %124 = vector.shape_cast %123 : vector<3xf32> to vector<3x1xf32>
    %125 = math.log %124 : vector<3x1xf32>
    %126 = arith.addf %119, %125 : vector<3x1xf32>
    %127 = vector.broadcast %126 : vector<3x1xf32> to vector<3x3xf32>
    %128 = arith.subf %117, %127 : vector<3x3xf32>
    %cst_57 = arith.constant dense<0xFF800000> : vector<3xf32>
    %129 = vector.multi_reduction <maximumf>, %128, %cst_57 [0] : vector<3x3xf32> to vector<3xf32>
    %130 = vector.shape_cast %129 : vector<3xf32> to vector<1x3xf32>
    %131 = vector.broadcast %130 : vector<1x3xf32> to vector<3x3xf32>
    %132 = arith.subf %128, %131 : vector<3x3xf32>
    %133 = math.exp %132 : vector<3x3xf32>
    %cst_58 = arith.constant dense<0.000000e+00> : vector<3xf32>
    %134 = vector.multi_reduction <add>, %133, %cst_58 [0] : vector<3x3xf32> to vector<3xf32>
    %135 = vector.shape_cast %134 : vector<3xf32> to vector<1x3xf32>
    %136 = math.log %135 : vector<1x3xf32>
    %137 = arith.addf %130, %136 : vector<1x3xf32>
    %138 = vector.broadcast %137 : vector<1x3xf32> to vector<3x3xf32>
    %139 = arith.subf %128, %138 : vector<3x3xf32>
    %cst_59 = arith.constant dense<0xFF800000> : vector<3xf32>
    %140 = vector.multi_reduction <maximumf>, %139, %cst_59 [1] : vector<3x3xf32> to vector<3xf32>
    %141 = vector.shape_cast %140 : vector<3xf32> to vector<3x1xf32>
    %142 = vector.broadcast %141 : vector<3x1xf32> to vector<3x3xf32>
    %143 = arith.subf %139, %142 : vector<3x3xf32>
    %144 = math.exp %143 : vector<3x3xf32>
    %cst_60 = arith.constant dense<0.000000e+00> : vector<3xf32>
    %145 = vector.multi_reduction <add>, %144, %cst_60 [1] : vector<3x3xf32> to vector<3xf32>
    %146 = vector.shape_cast %145 : vector<3xf32> to vector<3x1xf32>
    %147 = math.log %146 : vector<3x1xf32>
    %148 = arith.addf %141, %147 : vector<3x1xf32>
    %149 = vector.broadcast %148 : vector<3x1xf32> to vector<3x3xf32>
    %150 = arith.subf %139, %149 : vector<3x3xf32>
    %cst_61 = arith.constant dense<0xFF800000> : vector<3xf32>
    %151 = vector.multi_reduction <maximumf>, %150, %cst_61 [0] : vector<3x3xf32> to vector<3xf32>
    %152 = vector.shape_cast %151 : vector<3xf32> to vector<1x3xf32>
    %153 = vector.broadcast %152 : vector<1x3xf32> to vector<3x3xf32>
    %154 = arith.subf %150, %153 : vector<3x3xf32>
    %155 = math.exp %154 : vector<3x3xf32>
    %cst_62 = arith.constant dense<0.000000e+00> : vector<3xf32>
    %156 = vector.multi_reduction <add>, %155, %cst_62 [0] : vector<3x3xf32> to vector<3xf32>
    %157 = vector.shape_cast %156 : vector<3xf32> to vector<1x3xf32>
    %158 = math.log %157 : vector<1x3xf32>
    %159 = arith.addf %152, %158 : vector<1x3xf32>
    %160 = vector.broadcast %159 : vector<1x3xf32> to vector<3x3xf32>
    %161 = arith.subf %150, %160 : vector<3x3xf32>
    %cst_63 = arith.constant dense<0xFF800000> : vector<3xf32>
    %162 = vector.multi_reduction <maximumf>, %161, %cst_63 [1] : vector<3x3xf32> to vector<3xf32>
    %163 = vector.shape_cast %162 : vector<3xf32> to vector<3x1xf32>
    %164 = vector.broadcast %163 : vector<3x1xf32> to vector<3x3xf32>
    %165 = arith.subf %161, %164 : vector<3x3xf32>
    %166 = math.exp %165 : vector<3x3xf32>
    %cst_64 = arith.constant dense<0.000000e+00> : vector<3xf32>
    %167 = vector.multi_reduction <add>, %166, %cst_64 [1] : vector<3x3xf32> to vector<3xf32>
    %168 = vector.shape_cast %167 : vector<3xf32> to vector<3x1xf32>
    %169 = math.log %168 : vector<3x1xf32>
    %170 = arith.addf %163, %169 : vector<3x1xf32>
    %171 = vector.broadcast %170 : vector<3x1xf32> to vector<3x3xf32>
    %172 = arith.subf %161, %171 : vector<3x3xf32>
    %cst_65 = arith.constant dense<0xFF800000> : vector<3xf32>
    %173 = vector.multi_reduction <maximumf>, %172, %cst_65 [0] : vector<3x3xf32> to vector<3xf32>
    %174 = vector.shape_cast %173 : vector<3xf32> to vector<1x3xf32>
    %175 = vector.broadcast %174 : vector<1x3xf32> to vector<3x3xf32>
    %176 = arith.subf %172, %175 : vector<3x3xf32>
    %177 = math.exp %176 : vector<3x3xf32>
    %cst_66 = arith.constant dense<0.000000e+00> : vector<3xf32>
    %178 = vector.multi_reduction <add>, %177, %cst_66 [0] : vector<3x3xf32> to vector<3xf32>
    %179 = vector.shape_cast %178 : vector<3xf32> to vector<1x3xf32>
    %180 = math.log %179 : vector<1x3xf32>
    %181 = arith.addf %174, %180 : vector<1x3xf32>
    %182 = vector.broadcast %181 : vector<1x3xf32> to vector<3x3xf32>
    %183 = arith.subf %172, %182 : vector<3x3xf32>
    %cst_67 = arith.constant dense<0xFF800000> : vector<3xf32>
    %184 = vector.multi_reduction <maximumf>, %183, %cst_67 [1] : vector<3x3xf32> to vector<3xf32>
    %185 = vector.shape_cast %184 : vector<3xf32> to vector<3x1xf32>
    %186 = vector.broadcast %185 : vector<3x1xf32> to vector<3x3xf32>
    %187 = arith.subf %183, %186 : vector<3x3xf32>
    %188 = math.exp %187 : vector<3x3xf32>
    %cst_68 = arith.constant dense<0.000000e+00> : vector<3xf32>
    %189 = vector.multi_reduction <add>, %188, %cst_68 [1] : vector<3x3xf32> to vector<3xf32>
    %190 = vector.shape_cast %189 : vector<3xf32> to vector<3x1xf32>
    %191 = math.log %190 : vector<3x1xf32>
    %192 = arith.addf %185, %191 : vector<3x1xf32>
    %193 = vector.broadcast %192 : vector<3x1xf32> to vector<3x3xf32>
    %194 = arith.subf %183, %193 : vector<3x3xf32>
    %cst_69 = arith.constant dense<0xFF800000> : vector<3xf32>
    %195 = vector.multi_reduction <maximumf>, %194, %cst_69 [0] : vector<3x3xf32> to vector<3xf32>
    %196 = vector.shape_cast %195 : vector<3xf32> to vector<1x3xf32>
    %197 = vector.broadcast %196 : vector<1x3xf32> to vector<3x3xf32>
    %198 = arith.subf %194, %197 : vector<3x3xf32>
    %199 = math.exp %198 : vector<3x3xf32>
    %cst_70 = arith.constant dense<0.000000e+00> : vector<3xf32>
    %200 = vector.multi_reduction <add>, %199, %cst_70 [0] : vector<3x3xf32> to vector<3xf32>
    %201 = vector.shape_cast %200 : vector<3xf32> to vector<1x3xf32>
    %202 = math.log %201 : vector<1x3xf32>
    %203 = arith.addf %196, %202 : vector<1x3xf32>
    %204 = vector.broadcast %203 : vector<1x3xf32> to vector<3x3xf32>
    %205 = arith.subf %194, %204 : vector<3x3xf32>
    %cst_71 = arith.constant dense<0xFF800000> : vector<3xf32>
    %206 = vector.multi_reduction <maximumf>, %205, %cst_71 [1] : vector<3x3xf32> to vector<3xf32>
    %207 = vector.shape_cast %206 : vector<3xf32> to vector<3x1xf32>
    %208 = vector.broadcast %207 : vector<3x1xf32> to vector<3x3xf32>
    %209 = arith.subf %205, %208 : vector<3x3xf32>
    %210 = math.exp %209 : vector<3x3xf32>
    %cst_72 = arith.constant dense<0.000000e+00> : vector<3xf32>
    %211 = vector.multi_reduction <add>, %210, %cst_72 [1] : vector<3x3xf32> to vector<3xf32>
    %212 = vector.shape_cast %211 : vector<3xf32> to vector<3x1xf32>
    %213 = math.log %212 : vector<3x1xf32>
    %214 = arith.addf %207, %213 : vector<3x1xf32>
    %215 = vector.broadcast %214 : vector<3x1xf32> to vector<3x3xf32>
    %216 = arith.subf %205, %215 : vector<3x3xf32>
    %cst_73 = arith.constant dense<0xFF800000> : vector<3xf32>
    %217 = vector.multi_reduction <maximumf>, %216, %cst_73 [0] : vector<3x3xf32> to vector<3xf32>
    %218 = vector.shape_cast %217 : vector<3xf32> to vector<1x3xf32>
    %219 = vector.broadcast %218 : vector<1x3xf32> to vector<3x3xf32>
    %220 = arith.subf %216, %219 : vector<3x3xf32>
    %221 = math.exp %220 : vector<3x3xf32>
    %cst_74 = arith.constant dense<0.000000e+00> : vector<3xf32>
    %222 = vector.multi_reduction <add>, %221, %cst_74 [0] : vector<3x3xf32> to vector<3xf32>
    %223 = vector.shape_cast %222 : vector<3xf32> to vector<1x3xf32>
    %224 = math.log %223 : vector<1x3xf32>
    %225 = arith.addf %218, %224 : vector<1x3xf32>
    %226 = vector.broadcast %225 : vector<1x3xf32> to vector<3x3xf32>
    %227 = arith.subf %216, %226 : vector<3x3xf32>
    %cst_75 = arith.constant dense<0xFF800000> : vector<3xf32>
    %228 = vector.multi_reduction <maximumf>, %227, %cst_75 [1] : vector<3x3xf32> to vector<3xf32>
    %229 = vector.shape_cast %228 : vector<3xf32> to vector<3x1xf32>
    %230 = vector.broadcast %229 : vector<3x1xf32> to vector<3x3xf32>
    %231 = arith.subf %227, %230 : vector<3x3xf32>
    %232 = math.exp %231 : vector<3x3xf32>
    %cst_76 = arith.constant dense<0.000000e+00> : vector<3xf32>
    %233 = vector.multi_reduction <add>, %232, %cst_76 [1] : vector<3x3xf32> to vector<3xf32>
    %234 = vector.shape_cast %233 : vector<3xf32> to vector<3x1xf32>
    %235 = math.log %234 : vector<3x1xf32>
    %236 = arith.addf %229, %235 : vector<3x1xf32>
    %237 = vector.broadcast %236 : vector<3x1xf32> to vector<3x3xf32>
    %238 = arith.subf %227, %237 : vector<3x3xf32>
    %cst_77 = arith.constant dense<0xFF800000> : vector<3xf32>
    %239 = vector.multi_reduction <maximumf>, %238, %cst_77 [0] : vector<3x3xf32> to vector<3xf32>
    %240 = vector.shape_cast %239 : vector<3xf32> to vector<1x3xf32>
    %241 = vector.broadcast %240 : vector<1x3xf32> to vector<3x3xf32>
    %242 = arith.subf %238, %241 : vector<3x3xf32>
    %243 = math.exp %242 : vector<3x3xf32>
    %cst_78 = arith.constant dense<0.000000e+00> : vector<3xf32>
    %244 = vector.multi_reduction <add>, %243, %cst_78 [0] : vector<3x3xf32> to vector<3xf32>
    %245 = vector.shape_cast %244 : vector<3xf32> to vector<1x3xf32>
    %246 = math.log %245 : vector<1x3xf32>
    %247 = arith.addf %240, %246 : vector<1x3xf32>
    %248 = vector.broadcast %247 : vector<1x3xf32> to vector<3x3xf32>
    %249 = arith.subf %238, %248 : vector<3x3xf32>
    %cst_79 = arith.constant dense<0xFF800000> : vector<3xf32>
    %250 = vector.multi_reduction <maximumf>, %249, %cst_79 [1] : vector<3x3xf32> to vector<3xf32>
    %251 = vector.shape_cast %250 : vector<3xf32> to vector<3x1xf32>
    %252 = vector.broadcast %251 : vector<3x1xf32> to vector<3x3xf32>
    %253 = arith.subf %249, %252 : vector<3x3xf32>
    %254 = math.exp %253 : vector<3x3xf32>
    %cst_80 = arith.constant dense<0.000000e+00> : vector<3xf32>
    %255 = vector.multi_reduction <add>, %254, %cst_80 [1] : vector<3x3xf32> to vector<3xf32>
    %256 = vector.shape_cast %255 : vector<3xf32> to vector<3x1xf32>
    %257 = math.log %256 : vector<3x1xf32>
    %258 = arith.addf %251, %257 : vector<3x1xf32>
    %259 = vector.broadcast %258 : vector<3x1xf32> to vector<3x3xf32>
    %260 = arith.subf %249, %259 : vector<3x3xf32>
    %cst_81 = arith.constant dense<0xFF800000> : vector<3xf32>
    %261 = vector.multi_reduction <maximumf>, %260, %cst_81 [0] : vector<3x3xf32> to vector<3xf32>
    %262 = vector.shape_cast %261 : vector<3xf32> to vector<1x3xf32>
    %263 = vector.broadcast %262 : vector<1x3xf32> to vector<3x3xf32>
    %264 = arith.subf %260, %263 : vector<3x3xf32>
    %265 = math.exp %264 : vector<3x3xf32>
    %cst_82 = arith.constant dense<0.000000e+00> : vector<3xf32>
    %266 = vector.multi_reduction <add>, %265, %cst_82 [0] : vector<3x3xf32> to vector<3xf32>
    %267 = vector.shape_cast %266 : vector<3xf32> to vector<1x3xf32>
    %268 = math.log %267 : vector<1x3xf32>
    %269 = arith.addf %262, %268 : vector<1x3xf32>
    %270 = vector.broadcast %269 : vector<1x3xf32> to vector<3x3xf32>
    %271 = arith.subf %260, %270 : vector<3x3xf32>
    %272 = math.exp %271 : vector<3x3xf32>
    %273 = vector.extract_strided_slice %272 {offsets = [0, 0], sizes = [1, 1], strides = [1, 1]} : vector<3x3xf32> to vector<1x1xf32>
    %274 = vector.broadcast %273 : vector<1x1xf32> to vector<4x4xf32>
    %275 = arith.mulf %7, %274 : vector<4x4xf32>
    %276 = vector.extract_strided_slice %272 {offsets = [0, 0], sizes = [1, 1], strides = [1, 1]} : vector<3x3xf32> to vector<1x1xf32>
    %277 = vector.broadcast %276 : vector<1x1xf32> to vector<4x4xf32>
    %278 = arith.mulf %13, %277 : vector<4x4xf32>
    %279 = vector.extract_strided_slice %272 {offsets = [1, 0], sizes = [1, 1], strides = [1, 1]} : vector<3x3xf32> to vector<1x1xf32>
    %280 = vector.broadcast %279 : vector<1x1xf32> to vector<4x4xf32>
    %281 = arith.mulf %9, %280 : vector<4x4xf32>
    %282 = arith.addf %275, %281 : vector<4x4xf32>
    %283 = vector.extract_strided_slice %272 {offsets = [1, 0], sizes = [1, 1], strides = [1, 1]} : vector<3x3xf32> to vector<1x1xf32>
    %284 = vector.broadcast %283 : vector<1x1xf32> to vector<4x4xf32>
    %285 = arith.mulf %15, %284 : vector<4x4xf32>
    %286 = arith.addf %278, %285 : vector<4x4xf32>
    %287 = vector.extract_strided_slice %272 {offsets = [2, 0], sizes = [1, 1], strides = [1, 1]} : vector<3x3xf32> to vector<1x1xf32>
    %288 = vector.broadcast %287 : vector<1x1xf32> to vector<4x4xf32>
    %289 = arith.mulf %11, %288 : vector<4x4xf32>
    %290 = arith.addf %282, %289 : vector<4x4xf32>
    %291 = vector.extract_strided_slice %272 {offsets = [2, 0], sizes = [1, 1], strides = [1, 1]} : vector<3x3xf32> to vector<1x1xf32>
    %292 = vector.broadcast %291 : vector<1x1xf32> to vector<4x4xf32>
    %293 = arith.mulf %17, %292 : vector<4x4xf32>
    %294 = arith.addf %286, %293 : vector<4x4xf32>
    %295 = arith.truncf %1 : vector<4x4xf32> to vector<4x4xbf16>
    %296 = arith.truncf %290 : vector<4x4xf32> to vector<4x4xbf16>
    %cst_83 = arith.constant dense<0.000000e+00> : vector<4x4xf32>
    %297 = tpu.matmul %295, %296, %cst_83 {dimension_numbers = #tpu.dot_dimension_numbers<[0], [0], [1], [1], [0, 1, 1, 1], [], []>} : vector<4x4xbf16>, vector<4x4xbf16>, vector<4x4xf32> -> vector<4x4xf32>
    %cst_84 = arith.constant 1.42857146 : f32
    %298 = vector.broadcast %cst_84 : f32 to vector<4x4xf32>
    %299 = arith.mulf %297, %298 : vector<4x4xf32>
    %cst_85 = arith.constant dense<0xFF800000> : vector<4xf32>
    %300 = vector.multi_reduction <maximumf>, %299, %cst_85 [1] : vector<4x4xf32> to vector<4xf32>
    %301 = vector.shape_cast %300 : vector<4xf32> to vector<4x1xf32>
    %302 = vector.broadcast %301 : vector<4x1xf32> to vector<4x4xf32>
    %303 = arith.subf %299, %302 : vector<4x4xf32>
    %304 = math.exp %303 : vector<4x4xf32>
    %cst_86 = arith.constant dense<0.000000e+00> : vector<4xf32>
    %305 = vector.multi_reduction <add>, %304, %cst_86 [1] : vector<4x4xf32> to vector<4xf32>
    %306 = vector.shape_cast %305 : vector<4xf32> to vector<4x1xf32>
    %307 = tpu.reciprocal %306 {approx = true} : vector<4x1xf32> -> vector<4x1xf32>
    %308 = vector.broadcast %307 : vector<4x1xf32> to vector<4x4xf32>
    %309 = arith.mulf %304, %308 : vector<4x4xf32>
    %310 = arith.truncf %294 : vector<4x4xf32> to vector<4x4xbf16>
    %311 = arith.truncf %309 : vector<4x4xf32> to vector<4x4xbf16>
    %cst_87 = arith.constant dense<0.000000e+00> : vector<4x4xf32>
    %312 = tpu.matmul %310, %311, %cst_87 {dimension_numbers = #tpu.dot_dimension_numbers<[1], [1], [0], [0], [0, 0, 1, 0], [], []>} : vector<4x4xbf16>, vector<4x4xbf16>, vector<4x4xf32> -> vector<4x4xf32>
    %313 = vector.extract_strided_slice %272 {offsets = [0, 1], sizes = [1, 1], strides = [1, 1]} : vector<3x3xf32> to vector<1x1xf32>
    %314 = vector.broadcast %313 : vector<1x1xf32> to vector<4x4xf32>
    %315 = arith.mulf %7, %314 : vector<4x4xf32>
    %316 = vector.extract_strided_slice %272 {offsets = [0, 1], sizes = [1, 1], strides = [1, 1]} : vector<3x3xf32> to vector<1x1xf32>
    %317 = vector.broadcast %316 : vector<1x1xf32> to vector<4x4xf32>
    %318 = arith.mulf %13, %317 : vector<4x4xf32>
    %319 = vector.extract_strided_slice %272 {offsets = [1, 1], sizes = [1, 1], strides = [1, 1]} : vector<3x3xf32> to vector<1x1xf32>
    %320 = vector.broadcast %319 : vector<1x1xf32> to vector<4x4xf32>
    %321 = arith.mulf %9, %320 : vector<4x4xf32>
    %322 = arith.addf %315, %321 : vector<4x4xf32>
    %323 = vector.extract_strided_slice %272 {offsets = [1, 1], sizes = [1, 1], strides = [1, 1]} : vector<3x3xf32> to vector<1x1xf32>
    %324 = vector.broadcast %323 : vector<1x1xf32> to vector<4x4xf32>
    %325 = arith.mulf %15, %324 : vector<4x4xf32>
    %326 = arith.addf %318, %325 : vector<4x4xf32>
    %327 = vector.extract_strided_slice %272 {offsets = [2, 1], sizes = [1, 1], strides = [1, 1]} : vector<3x3xf32> to vector<1x1xf32>
    %328 = vector.broadcast %327 : vector<1x1xf32> to vector<4x4xf32>
    %329 = arith.mulf %11, %328 : vector<4x4xf32>
    %330 = arith.addf %322, %329 : vector<4x4xf32>
    %331 = vector.extract_strided_slice %272 {offsets = [2, 1], sizes = [1, 1], strides = [1, 1]} : vector<3x3xf32> to vector<1x1xf32>
    %332 = vector.broadcast %331 : vector<1x1xf32> to vector<4x4xf32>
    %333 = arith.mulf %17, %332 : vector<4x4xf32>
    %334 = arith.addf %326, %333 : vector<4x4xf32>
    %335 = arith.truncf %3 : vector<4x4xf32> to vector<4x4xbf16>
    %336 = arith.truncf %330 : vector<4x4xf32> to vector<4x4xbf16>
    %cst_88 = arith.constant dense<0.000000e+00> : vector<4x4xf32>
    %337 = tpu.matmul %335, %336, %cst_88 {dimension_numbers = #tpu.dot_dimension_numbers<[0], [0], [1], [1], [0, 1, 1, 1], [], []>} : vector<4x4xbf16>, vector<4x4xbf16>, vector<4x4xf32> -> vector<4x4xf32>
    %cst_89 = arith.constant 1.42857146 : f32
    %338 = vector.broadcast %cst_89 : f32 to vector<4x4xf32>
    %339 = arith.mulf %337, %338 : vector<4x4xf32>
    %cst_90 = arith.constant dense<0xFF800000> : vector<4xf32>
    %340 = vector.multi_reduction <maximumf>, %339, %cst_90 [1] : vector<4x4xf32> to vector<4xf32>
    %341 = vector.shape_cast %340 : vector<4xf32> to vector<4x1xf32>
    %342 = vector.broadcast %341 : vector<4x1xf32> to vector<4x4xf32>
    %343 = arith.subf %339, %342 : vector<4x4xf32>
    %344 = math.exp %343 : vector<4x4xf32>
    %cst_91 = arith.constant dense<0.000000e+00> : vector<4xf32>
    %345 = vector.multi_reduction <add>, %344, %cst_91 [1] : vector<4x4xf32> to vector<4xf32>
    %346 = vector.shape_cast %345 : vector<4xf32> to vector<4x1xf32>
    %347 = tpu.reciprocal %346 {approx = true} : vector<4x1xf32> -> vector<4x1xf32>
    %348 = vector.broadcast %347 : vector<4x1xf32> to vector<4x4xf32>
    %349 = arith.mulf %344, %348 : vector<4x4xf32>
    %350 = arith.truncf %334 : vector<4x4xf32> to vector<4x4xbf16>
    %351 = arith.truncf %349 : vector<4x4xf32> to vector<4x4xbf16>
    %cst_92 = arith.constant dense<0.000000e+00> : vector<4x4xf32>
    %352 = tpu.matmul %350, %351, %cst_92 {dimension_numbers = #tpu.dot_dimension_numbers<[1], [1], [0], [0], [0, 0, 1, 0], [], []>} : vector<4x4xbf16>, vector<4x4xbf16>, vector<4x4xf32> -> vector<4x4xf32>
    %353 = vector.extract_strided_slice %272 {offsets = [0, 2], sizes = [1, 1], strides = [1, 1]} : vector<3x3xf32> to vector<1x1xf32>
    %354 = vector.broadcast %353 : vector<1x1xf32> to vector<4x4xf32>
    %355 = arith.mulf %7, %354 : vector<4x4xf32>
    %356 = vector.extract_strided_slice %272 {offsets = [0, 2], sizes = [1, 1], strides = [1, 1]} : vector<3x3xf32> to vector<1x1xf32>
    %357 = vector.broadcast %356 : vector<1x1xf32> to vector<4x4xf32>
    %358 = arith.mulf %13, %357 : vector<4x4xf32>
    %359 = vector.extract_strided_slice %272 {offsets = [1, 2], sizes = [1, 1], strides = [1, 1]} : vector<3x3xf32> to vector<1x1xf32>
    %360 = vector.broadcast %359 : vector<1x1xf32> to vector<4x4xf32>
    %361 = arith.mulf %9, %360 : vector<4x4xf32>
    %362 = arith.addf %355, %361 : vector<4x4xf32>
    %363 = vector.extract_strided_slice %272 {offsets = [1, 2], sizes = [1, 1], strides = [1, 1]} : vector<3x3xf32> to vector<1x1xf32>
    %364 = vector.broadcast %363 : vector<1x1xf32> to vector<4x4xf32>
    %365 = arith.mulf %15, %364 : vector<4x4xf32>
    %366 = arith.addf %358, %365 : vector<4x4xf32>
    %367 = vector.extract_strided_slice %272 {offsets = [2, 2], sizes = [1, 1], strides = [1, 1]} : vector<3x3xf32> to vector<1x1xf32>
    %368 = vector.broadcast %367 : vector<1x1xf32> to vector<4x4xf32>
    %369 = arith.mulf %11, %368 : vector<4x4xf32>
    %370 = arith.addf %362, %369 : vector<4x4xf32>
    %371 = vector.extract_strided_slice %272 {offsets = [2, 2], sizes = [1, 1], strides = [1, 1]} : vector<3x3xf32> to vector<1x1xf32>
    %372 = vector.broadcast %371 : vector<1x1xf32> to vector<4x4xf32>
    %373 = arith.mulf %17, %372 : vector<4x4xf32>
    %374 = arith.addf %366, %373 : vector<4x4xf32>
    %375 = arith.truncf %5 : vector<4x4xf32> to vector<4x4xbf16>
    %376 = arith.truncf %370 : vector<4x4xf32> to vector<4x4xbf16>
    %cst_93 = arith.constant dense<0.000000e+00> : vector<4x4xf32>
    %377 = tpu.matmul %375, %376, %cst_93 {dimension_numbers = #tpu.dot_dimension_numbers<[0], [0], [1], [1], [0, 1, 1, 1], [], []>} : vector<4x4xbf16>, vector<4x4xbf16>, vector<4x4xf32> -> vector<4x4xf32>
    %cst_94 = arith.constant 1.42857146 : f32
    %378 = vector.broadcast %cst_94 : f32 to vector<4x4xf32>
    %379 = arith.mulf %377, %378 : vector<4x4xf32>
    %cst_95 = arith.constant dense<0xFF800000> : vector<4xf32>
    %380 = vector.multi_reduction <maximumf>, %379, %cst_95 [1] : vector<4x4xf32> to vector<4xf32>
    %381 = vector.shape_cast %380 : vector<4xf32> to vector<4x1xf32>
    %382 = vector.broadcast %381 : vector<4x1xf32> to vector<4x4xf32>
    %383 = arith.subf %379, %382 : vector<4x4xf32>
    %384 = math.exp %383 : vector<4x4xf32>
    %cst_96 = arith.constant dense<0.000000e+00> : vector<4xf32>
    %385 = vector.multi_reduction <add>, %384, %cst_96 [1] : vector<4x4xf32> to vector<4xf32>
    %386 = vector.shape_cast %385 : vector<4xf32> to vector<4x1xf32>
    %387 = tpu.reciprocal %386 {approx = true} : vector<4x1xf32> -> vector<4x1xf32>
    %388 = vector.broadcast %387 : vector<4x1xf32> to vector<4x4xf32>
    %389 = arith.mulf %384, %388 : vector<4x4xf32>
    %390 = arith.truncf %374 : vector<4x4xf32> to vector<4x4xbf16>
    %391 = arith.truncf %389 : vector<4x4xf32> to vector<4x4xbf16>
    %cst_97 = arith.constant dense<0.000000e+00> : vector<4x4xf32>
    %392 = tpu.matmul %390, %391, %cst_97 {dimension_numbers = #tpu.dot_dimension_numbers<[1], [1], [0], [0], [0, 0, 1, 0], [], []>} : vector<4x4xbf16>, vector<4x4xbf16>, vector<4x4xf32> -> vector<4x4xf32>
    %393 = vector.extract_strided_slice %272 {offsets = [0, 0], sizes = [1, 1], strides = [1, 1]} : vector<3x3xf32> to vector<1x1xf32>
    %394 = vector.broadcast %393 : vector<1x1xf32> to vector<4x4xf32>
    %395 = arith.mulf %312, %394 : vector<4x4xf32>
    %396 = vector.extract_strided_slice %272 {offsets = [0, 1], sizes = [1, 1], strides = [1, 1]} : vector<3x3xf32> to vector<1x1xf32>
    %397 = vector.broadcast %396 : vector<1x1xf32> to vector<4x4xf32>
    %398 = arith.mulf %352, %397 : vector<4x4xf32>
    %399 = arith.addf %395, %398 : vector<4x4xf32>
    %400 = vector.extract_strided_slice %272 {offsets = [0, 2], sizes = [1, 1], strides = [1, 1]} : vector<3x3xf32> to vector<1x1xf32>
    %401 = vector.broadcast %400 : vector<1x1xf32> to vector<4x4xf32>
    %402 = arith.mulf %392, %401 : vector<4x4xf32>
    %403 = arith.addf %399, %402 : vector<4x4xf32>
    %c0_98 = arith.constant 0 : index
    %c0_99 = arith.constant 0 : index
    %c0_100 = arith.constant 0 : index
    %404 = vector.load %arg5[%c0_98, %c0_99, %c0_100] : memref<1x4x16xf32, #tpu.memory_space<vmem>>, vector<1x4x4xf32>
    %405 = vector.shape_cast %404 : vector<1x4x4xf32> to vector<4x4xf32>
    %406 = vector.shape_cast %403 : vector<4x4xf32> to vector<1x4x4xf32>
    tpu.vector_store %arg5[%c0_98, %c0_99, %c0_100], %406 {strides = array<i32>} : memref<1x4x16xf32, #tpu.memory_space<vmem>>, vector<1x4x4xf32>,
    %407 = vector.extract_strided_slice %272 {offsets = [1, 0], sizes = [1, 1], strides = [1, 1]} : vector<3x3xf32> to vector<1x1xf32>
    %408 = vector.broadcast %407 : vector<1x1xf32> to vector<4x4xf32>
    %409 = arith.mulf %312, %408 : vector<4x4xf32>
    %410 = vector.extract_strided_slice %272 {offsets = [1, 1], sizes = [1, 1], strides = [1, 1]} : vector<3x3xf32> to vector<1x1xf32>
    %411 = vector.broadcast %410 : vector<1x1xf32> to vector<4x4xf32>
    %412 = arith.mulf %352, %411 : vector<4x4xf32>
    %413 = arith.addf %409, %412 : vector<4x4xf32>
    %414 = vector.extract_strided_slice %272 {offsets = [1, 2], sizes = [1, 1], strides = [1, 1]} : vector<3x3xf32> to vector<1x1xf32>
    %415 = vector.broadcast %414 : vector<1x1xf32> to vector<4x4xf32>
    %416 = arith.mulf %392, %415 : vector<4x4xf32>
    %417 = arith.addf %413, %416 : vector<4x4xf32>
    %c0_101 = arith.constant 0 : index
    %c0_102 = arith.constant 0 : index
    %c4_103 = arith.constant 4 : index
    %418 = vector.load %arg5[%c0_101, %c0_102, %c4_103] : memref<1x4x16xf32, #tpu.memory_space<vmem>>, vector<1x4x4xf32>
    %419 = vector.shape_cast %418 : vector<1x4x4xf32> to vector<4x4xf32>
    %420 = vector.shape_cast %417 : vector<4x4xf32> to vector<1x4x4xf32>
    tpu.vector_store %arg5[%c0_101, %c0_102, %c4_103], %420 {strides = array<i32>} : memref<1x4x16xf32, #tpu.memory_space<vmem>>, vector<1x4x4xf32>,
    %421 = vector.extract_strided_slice %272 {offsets = [2, 0], sizes = [1, 1], strides = [1, 1]} : vector<3x3xf32> to vector<1x1xf32>
    %422 = vector.broadcast %421 : vector<1x1xf32> to vector<4x4xf32>
    %423 = arith.mulf %312, %422 : vector<4x4xf32>
    %424 = vector.extract_strided_slice %272 {offsets = [2, 1], sizes = [1, 1], strides = [1, 1]} : vector<3x3xf32> to vector<1x1xf32>
    %425 = vector.broadcast %424 : vector<1x1xf32> to vector<4x4xf32>
    %426 = arith.mulf %352, %425 : vector<4x4xf32>
    %427 = arith.addf %423, %426 : vector<4x4xf32>
    %428 = vector.extract_strided_slice %272 {offsets = [2, 2], sizes = [1, 1], strides = [1, 1]} : vector<3x3xf32> to vector<1x1xf32>
    %429 = vector.broadcast %428 : vector<1x1xf32> to vector<4x4xf32>
    %430 = arith.mulf %392, %429 : vector<4x4xf32>
    %431 = arith.addf %427, %430 : vector<4x4xf32>
    %c0_104 = arith.constant 0 : index
    %c0_105 = arith.constant 0 : index
    %c8_106 = arith.constant 8 : index
    %432 = vector.load %arg5[%c0_104, %c0_105, %c8_106] : memref<1x4x16xf32, #tpu.memory_space<vmem>>, vector<1x4x4xf32>
    %433 = vector.shape_cast %432 : vector<1x4x4xf32> to vector<4x4xf32>
    %434 = vector.shape_cast %431 : vector<4x4xf32> to vector<1x4x4xf32>
    tpu.vector_store %arg5[%c0_104, %c0_105, %c8_106], %434 {strides = array<i32>} : memref<1x4x16xf32, #tpu.memory_space<vmem>>, vector<1x4x4xf32>,
    %c0_107 = arith.constant 0 : index
    %c0_108 = arith.constant 0 : index
    %c12 = arith.constant 12 : index
    %435 = vector.load %arg3[%c0_107, %c0_108, %c12] : memref<1x4x16xf32, #tpu.memory_space<vmem>>, vector<1x4x4xf32>
    %436 = vector.shape_cast %435 : vector<1x4x4xf32> to vector<4x4xf32>
    %c0_109 = arith.constant 0 : index
    %c0_110 = arith.constant 0 : index
    %c12_111 = arith.constant 12 : index
    %437 = vector.load %arg5[%c0_109, %c0_110, %c12_111] : memref<1x4x16xf32, #tpu.memory_space<vmem>>, vector<1x4x4xf32>
    %438 = vector.shape_cast %437 : vector<1x4x4xf32> to vector<4x4xf32>
    %439 = vector.shape_cast %436 : vector<4x4xf32> to vector<1x4x4xf32>
    tpu.vector_store %arg5[%c0_109, %c0_110, %c12_111], %439 {strides = array<i32>} : memref<1x4x16xf32, #tpu.memory_space<vmem>>, vector<1x4x4xf32>,
    return
  }
  func.func @transform_0(%arg0: i32) -> (i32, i32, i32) {
    %c0_i32 = arith.constant 0 : i32
    %c0_i32_0 = arith.constant 0 : i32
    %c0_i32_1 = arith.constant 0 : i32
    return %arg0, %c0_i32, %c0_i32_0 : i32, i32, i32
  }
  func.func @transform_1(%arg0: i32) -> (i32, i32, i32) {
    %c0_i32 = arith.constant 0 : i32
    %c0_i32_0 = arith.constant 0 : i32
    %c0_i32_1 = arith.constant 0 : i32
    return %arg0, %c0_i32, %c0_i32_0 : i32, i32, i32
  }
  func.func @transform_2(%arg0: i32) -> (i32, i32, i32) {
    %c0_i32 = arith.constant 0 : i32
    %c0_i32_0 = arith.constant 0 : i32
    %c0_i32_1 = arith.constant 0 : i32
    return %arg0, %c0_i32, %c0_i32_0 : i32, i32, i32
  }
  func.func @transform_3(%arg0: i32) -> (i32, i32, i32) {
    %c0_i32 = arith.constant 0 : i32
    %c0_i32_0 = arith.constant 0 : i32
    %c0_i32_1 = arith.constant 0 : i32
    return %arg0, %c0_i32, %c0_i32_0 : i32, i32, i32
  }
  func.func @transform_4(%arg0: i32) -> (i32, i32, i32) {
    %c0_i32 = arith.constant 0 : i32
    %c0_i32_0 = arith.constant 0 : i32
    %c0_i32_1 = arith.constant 0 : i32
    return %arg0, %c0_i32, %c0_i32_0 : i32, i32, i32
  }
}

</mosaic_0001>

<llo_original>
// kernel: tpu_custom_call.1
$region0: #{tpu_custom_call.1}
  #allocation0 [shape = 'u32[]', space=smem, size = 0x4, offset = 0x4, fixed_abs, tag = 'smem constant byte address 0x4 - core index']
  #allocation1 [shape = 'u32[144,128]{1,0:T(1,128)}', space=vmem, size = 0x12000, scoped, tag = 'internal scratch']
  %s0 = inlined_call_operand.vmem [shape: f32[2,4,16], index: 0, kind: input, shape index: {}]
  %s1 = inlined_call_operand.hbm [shape: f32[2,4,16], index: 1, kind: input, shape index: {}]
  %s2 = inlined_call_operand.vmem [shape: f32[2,4,16], index: 2, kind: input, shape index: {}]
  %s3 = inlined_call_operand.vmem [shape: f32[2,3,3], index: 3, kind: input, shape index: {}]
  %s4 = inlined_call_operand.hbm [shape: f32[2,4,16], index: 4, kind: output, shape index: {}]
  %s5 = sld [smem:[#allocation0]]
  $region53: #{tpu_custom_call.1} parent=0
    _
  %s7 = ssub.s32 1, %s5
  %s8 = scalar_select 0, %s7, %s5
  $region1: #{tpu_custom_call.1} parent=0
    #allocation2 [shape = 'u8[4096]{0}', space=vmem, size = 0x1000, scoped, tag = 'input window, operand 1']
    #allocation3 [shape = 's32[2]{0}', space=sflag, size = 0x8, scoped, tag = 'scoped memory for tpu_custom_call.1']
    #allocation4 [shape = 's32[2]{0}', space=sflag, size = 0x8, scoped, tag = 'scoped memory for tpu_custom_call.1']
    #allocation5 [shape = 'u8[4096]{0}', space=vmem, size = 0x1000, scoped, tag = 'output window, operand 0']
    %9 = vsyncpa [#allocation3], 0
    %s10 = scalar_lea.sflag [#allocation3], 1
    %11 = vsyncpa %s10, 0
    %12 = vsyncpa [#allocation4], 0
    %s13 = scalar_lea.sflag [#allocation4], 1
    %14 = vsyncpa %s13, 0
    loop: start=0, step=1, limit=4
    $region2: #{tpu_custom_call.1} parent=1 // loop_pre_header
      _
    $region3: #{tpu_custom_call.1} parent=1 // loop_header
      %s16 = sphi 0, %s20
      %p17 = scmp.ge.s32.totalorder %s16, 4
      %s26 = sphi 0, %s28
      %s29 = sphi 0, %s26
      %s30 = sphi 0, %s29
      %s46 = sphi 0, %s30
      %s52 = sphi 0, %s54
      %s55 = sphi 0, %s52
      %s56 = sphi 0, %s55
      %s72 = sphi 0, %s56
      %s78 = sphi 0, %s80
      %s81 = sphi 0, %s78
      %s82 = sphi 0, %s81
      %s98 = sphi 0, %s82
      %s104 = sphi 0, %s106
      %s107 = sphi 0, %s104
      %s108 = sphi 0, %s107
      %s124 = sphi 0, %s108
      %s130 = sphi 0, %s132
      %s133 = sphi 0, %s130
      %s134 = sphi 0, %s133
      %s150 = sphi 0, %s134
    $region4: #{tpu_custom_call.1} parent=1 // loop_header_branch
      %19 = sbr.rel (%p17) target = $region8
    $region5: #{tpu_custom_call.1} parent=1 // loop_body
      %s21 = ssub.s32 %s16, 1
      %s22 = ssub.s32 %s16, 2
      %s23 = sadd.s32 %s16, 1
      %s24 = ssub.s32 %s16, %s23
      %p25 = scmp.eq.s32.totalorder %s24, 0
      %s27 = sadd.s32 %s26, 1
      %s28 = scalar_select %p25, %s26, %s27
      %p31 = pneg %p25
      %p32 = scmp.eq.s32.totalorder %s16, 1
      %p33 = por %p31, %p32
      %p34 = scmp.ne.s32.totalorder %s26, %s29
      %p35 = scmp.eq.s32.totalorder %s16, 0
      %p36 = por %p34, %p35
      %p37 = scmp.ne.s32.totalorder %s26, %s29
      %p38 = scmp.eq.s32.totalorder %s21, 1
      %p39 = por %p37, %p38
      %p40 = scmp.ne.s32.totalorder %s29, %s30
      %p41 = scmp.eq.s32.totalorder %s21, 0
      %p42 = por %p40, %p41
      %p43 = scmp.ne.s32.totalorder %s29, %s30
      %p44 = scmp.eq.s32.totalorder %s22, 1
      %p45 = por %p43, %p44
      %p47 = scmp.ne.s32.totalorder %s30, %s46
      %p48 = scmp.eq.s32.totalorder %s22, 0
      %p49 = por %p47, %p48
      %s50 = ssub.s32 %s16, %s23
      %p51 = scmp.eq.s32.totalorder %s50, 0
      %s53 = sadd.s32 %s52, 1
      %s54 = scalar_select %p51, %s52, %s53
      %p57 = pneg %p51
      %p58 = scmp.eq.s32.totalorder %s16, 1
      %p59 = por %p57, %p58
      %p60 = scmp.ne.s32.totalorder %s52, %s55
      %p61 = scmp.eq.s32.totalorder %s16, 0
      %p62 = por %p60, %p61
      %p63 = scmp.ne.s32.totalorder %s52, %s55
      %p64 = scmp.eq.s32.totalorder %s21, 1
      %p65 = por %p63, %p64
      %p66 = scmp.ne.s32.totalorder %s55, %s56
      %p67 = scmp.eq.s32.totalorder %s21, 0
      %p68 = por %p66, %p67
      %p69 = scmp.ne.s32.totalorder %s55, %s56
      %p70 = scmp.eq.s32.totalorder %s22, 1
      %p71 = por %p69, %p70
      %p73 = scmp.ne.s32.totalorder %s56, %s72
      %p74 = scmp.eq.s32.totalorder %s22, 0
      %p75 = por %p73, %p74
      %s76 = ssub.s32 %s16, %s23
      %p77 = scmp.eq.s32.totalorder %s76, 0
      %s79 = sadd.s32 %s78, 1
      %s80 = scalar_select %p77, %s78, %s79
      %p83 = pneg %p77
      %p84 = scmp.eq.s32.totalorder %s16, 1
      %p85 = por %p83, %p84
      %p86 = scmp.ne.s32.totalorder %s78, %s81
      %p87 = scmp.eq.s32.totalorder %s16, 0
      %p88 = por %p86, %p87
      %p89 = scmp.ne.s32.totalorder %s78, %s81
      %p90 = scmp.eq.s32.totalorder %s21, 1
      %p91 = por %p89, %p90
      %p92 = scmp.ne.s32.totalorder %s81, %s82
      %p93 = scmp.eq.s32.totalorder %s21, 0
      %p94 = por %p92, %p93
      %p95 = scmp.ne.s32.totalorder %s81, %s82
      %p96 = scmp.eq.s32.totalorder %s22, 1
      %p97 = por %p95, %p96
      %p99 = scmp.ne.s32.totalorder %s82, %s98
      %p100 = scmp.eq.s32.totalorder %s22, 0
      %p101 = por %p99, %p100
      %s102 = ssub.s32 %s16, %s23
      %p103 = scmp.eq.s32.totalorder %s102, 0
      %s105 = sadd.s32 %s104, 1
      %s106 = scalar_select %p103, %s104, %s105
      %p109 = pneg %p103
      %p110 = scmp.eq.s32.totalorder %s16, 1
      %p111 = por %p109, %p110
      %p112 = scmp.ne.s32.totalorder %s104, %s107
      %p113 = scmp.eq.s32.totalorder %s16, 0
      %p114 = por %p112, %p113
      %p115 = scmp.ne.s32.totalorder %s104, %s107
      %p116 = scmp.eq.s32.totalorder %s21, 1
      %p117 = por %p115, %p116
      %p118 = scmp.ne.s32.totalorder %s107, %s108
      %p119 = scmp.eq.s32.totalorder %s21, 0
      %p120 = por %p118, %p119
      %p121 = scmp.ne.s32.totalorder %s107, %s108
      %p122 = scmp.eq.s32.totalorder %s22, 1
      %p123 = por %p121, %p122
      %p125 = scmp.ne.s32.totalorder %s108, %s124
      %p126 = scmp.eq.s32.totalorder %s22, 0
      %p127 = por %p125, %p126
      %s128 = ssub.s32 %s16, %s23
      %p129 = scmp.eq.s32.totalorder %s128, 0
      %s131 = sadd.s32 %s130, 1
      %s132 = scalar_select %p129, %s130, %s131
      %p135 = pneg %p129
      %p136 = scmp.eq.s32.totalorder %s16, 1
      %p137 = por %p135, %p136
      %p138 = scmp.ne.s32.totalorder %s130, %s133
      %p139 = scmp.eq.s32.totalorder %s16, 0
      %p140 = por %p138, %p139
      %p141 = scmp.ne.s32.totalorder %s130, %s133
      %p142 = scmp.eq.s32.totalorder %s21, 1
      %p143 = por %p141, %p142
      %p144 = scmp.ne.s32.totalorder %s133, %s134
      %p145 = scmp.eq.s32.totalorder %s21, 0
      %p146 = por %p144, %p145
      %p147 = scmp.ne.s32.totalorder %s133, %s134
      %p148 = scmp.eq.s32.totalorder %s22, 1
      %p149 = por %p147, %p148
      %p151 = scmp.ne.s32.totalorder %s134, %s150
      %p152 = scmp.eq.s32.totalorder %s22, 0
      %p153 = por %p151, %p152
      %p154 = scmp.le.s32.totalorder 1, %s16
      %p155 = scmp.lt.s32.totalorder %s16, 3
      %p156 = pnand %p154, %p155
      %p157 = pneg %p156
      // Predicated region
      $region9: #{tpu_custom_call.1} parent=5 // pred_check
        _
      $region10: #{tpu_custom_call.1} parent=5 // pred_check_branch
        %159 = sbr.rel (%p156) target = $region12
      $region11: #{tpu_custom_call.1} parent=5 // pred_region
        %s160 = ssub.s32 %s16, 1
      $region12: #{tpu_custom_call.1} parent=5 // pred_fallthru
        _
      %p161 = scmp.lt.s32.totalorder %s16, 2
      // Predicated region
      $region13: #{tpu_custom_call.1} parent=5 // pred_check
        %p162 = pneg %p161
      $region14: #{tpu_custom_call.1} parent=5 // pred_check_branch
        %164 = sbr.rel (%p162) target = $region16
      $region15: #{tpu_custom_call.1} parent=5 // pred_region
        // Predicated region
        $region17: #{tpu_custom_call.1} parent=15 // pred_check
          %p165 = pneg %p36
        $region18: #{tpu_custom_call.1} parent=15 // pred_check_branch
          %167 = sbr.rel (%p165) target = $region20
        $region19: #{tpu_custom_call.1} parent=15 // pred_region
          %p168 = scmp.lt.s32.totalorder %s16, 1
          %s169 = scalar_select %p168, %s16, 1
          %s170 = smul.addr %s169, 4
          %s171 = scalar_lea.vmem %s0, %s170
        $region20: #{tpu_custom_call.1} parent=15 // pred_fallthru
          _
        // Predicated region
        $region21: #{tpu_custom_call.1} parent=15 // pred_check
          %p172 = pneg %p62
        $region22: #{tpu_custom_call.1} parent=15 // pred_check_branch
          %174 = sbr.rel (%p172) target = $region24
        $region23: #{tpu_custom_call.1} parent=15 // pred_region
          %s175 = sand.u32 %s52, 1
          %s176 = scalar_lea.sflag [#allocation3], %s175
          %s177 = sand.u32 %s52, 1
          %s178 = smul.addr %s177, 4
          %s179 = scalar_lea.vmem [#allocation2], %s178
          %s181 = ssub.s32 64, 64
          %182 = vsyncadd %s176, %s181
          %s183 = smul.addr %s16, 64
          %s184 = scalar_lea.hbm %s1, %s183
          %s186 = sshll.u32 %s179, 4
          %s187 = int_to_ptr.vmem [resolvable:$true] %s186
          %189 = dma.hbm_to_vmem [thread:$0]  %s184, 64, %s187, %s176
        $region24: #{tpu_custom_call.1} parent=15 // pred_fallthru
          _
        // Predicated region
        $region25: #{tpu_custom_call.1} parent=15 // pred_check
          %p190 = pneg %p88
        $region26: #{tpu_custom_call.1} parent=15 // pred_check_branch
          %192 = sbr.rel (%p190) target = $region28
        $region27: #{tpu_custom_call.1} parent=15 // pred_region
          %p193 = scmp.lt.s32.totalorder %s16, 1
          %s194 = scalar_select %p193, %s16, 1
          %s195 = smul.addr %s194, 4
          %s196 = scalar_lea.vmem %s2, %s195
        $region28: #{tpu_custom_call.1} parent=15 // pred_fallthru
          _
        // Predicated region
        $region29: #{tpu_custom_call.1} parent=15 // pred_check
          %p197 = pneg %p114
        $region30: #{tpu_custom_call.1} parent=15 // pred_check_branch
          %199 = sbr.rel (%p197) target = $region32
        $region31: #{tpu_custom_call.1} parent=15 // pred_region
          %p200 = scmp.lt.s32.totalorder %s16, 1
          %s201 = scalar_select %p200, %s16, 1
          %s202 = smul.addr %s201, 4
          %s203 = scalar_lea.vmem %s3, %s202
        $region32: #{tpu_custom_call.1} parent=15 // pred_fallthru
          _
      $region16: #{tpu_custom_call.1} parent=5 // pred_fallthru
        _
      %p204 = scmp.le.s32.totalorder 1, %s16
      %p205 = scmp.lt.s32.totalorder %s16, 3
      %p206 = pnand %p204, %p205
      %p207 = pneg %p206
      // Predicated region
      $region33: #{tpu_custom_call.1} parent=5 // pred_check
        _
      $region34: #{tpu_custom_call.1} parent=5 // pred_check_branch
        %209 = sbr.rel (%p206) target = $region36
      $region35: #{tpu_custom_call.1} parent=5 // pred_region
        %s210 = ssub.s32 %s16, 1
        %s211 = sand.u32 %s55, 1
        %s212 = scalar_lea.sflag [#allocation3], %s211
        %s213 = sand.u32 %s55, 1
        %s214 = smul.addr %s213, 4
        %s215 = scalar_lea.vmem [#allocation2], %s214
        // Predicated region
        $region37: #{tpu_custom_call.1} parent=35 // pred_check
          %p216 = pneg %p68
        $region38: #{tpu_custom_call.1} parent=35 // pred_check_branch
          %218 = sbr.rel (%p216) target = $region40
        $region39: #{tpu_custom_call.1} parent=35 // pred_region
          %219 = dma.done %s212, 64
        $region40: #{tpu_custom_call.1} parent=35 // pred_fallthru
          _
        %p220 = scmp.lt.s32.totalorder %s21, 1
        %s221 = scalar_select %p220, %s21, 1
        %s222 = smul.addr %s221, 4
        %s223 = scalar_lea.vmem %s0, %s222
        %p224 = pneg %p42
        %p225 = pneg %p39
        %s226 = sand.u32 %s55, 1
        %s227 = scalar_lea.sflag [#allocation3], %s226
        %s228 = sand.u32 %s55, 1
        %s229 = smul.addr %s228, 4
        %s230 = scalar_lea.vmem [#allocation2], %s229
        %p231 = pneg %p68
        %p232 = pneg %p65
        %p233 = scmp.lt.s32.totalorder %s21, 1
        %s234 = scalar_select %p233, %s21, 1
        %s235 = smul.addr %s234, 4
        %s236 = scalar_lea.vmem %s2, %s235
        %p237 = pneg %p94
        %p238 = pneg %p91
        %p239 = scmp.lt.s32.totalorder %s21, 1
        %s240 = scalar_select %p239, %s21, 1
        %s241 = smul.addr %s240, 4
        %s242 = scalar_lea.vmem %s3, %s241
        %p243 = pneg %p120
        %p244 = pneg %p117
        %p245 = pneg %p146
        %p246 = pneg %p143
        %s247 = sand.u32 %s133, 1
        %s248 = scalar_lea.sflag [#allocation4], %s247
        %s249 = sand.u32 %s133, 1
        %s250 = smul.addr %s249, 4
        %s251 = scalar_lea.vmem [#allocation5], %s250
        %p252 = scmp.lt.s32.totalorder %s21, 1
        %s253 = scalar_select %p252, %s21, 1
        %s254 = smul.addr %s253, 4
        %s255 = scalar_lea.vmem %s0, %s254
        %p256 = scmp.lt.s32.totalorder %s21, 1
        %s257 = scalar_select %p256, %s21, 1
        %s258 = smul.addr %s257, 4
        %s259 = scalar_lea.vmem %s2, %s258
        %p260 = scmp.lt.s32.totalorder %s21, 1
        %s261 = scalar_select %p260, %s21, 1
        %s262 = smul.addr %s261, 4
        %s263 = scalar_lea.vmem %s3, %s262
        %v265 = vld [vmem:[%s255] sm:$0xf]
        %v266 = vld [vmem:[%s215] sm:$0xf]
        %v267 = vld [vmem:[%s259] sm:$0xf]
        %v268 = vlaneseq
        %v269 = vshrl.u32 %v268, 7
        %vm270 = vcmask 27648
        %v271 = vsel %vm270, %v265, 0.0
        %v272 = vrot.slane %v271, 4
        %v273 = vadd.f32 %v271, %v272
        %v274 = vrot.slane %v273, 2
        %v275 = vadd.f32 %v273, %v274
        %v276 = vrot.slane %v275, 1
        %v277 = vadd.f32 %v275, %v276
        %v278 = vrcp.pop 4.0
        %v279 = vmul.f32 %v277, %v278
        %v280 = vsel %vm270, %v266, 0.0
        %v281 = vrot.slane %v280, 4
        %v282 = vadd.f32 %v280, %v281
        %v283 = vrot.slane %v282, 2
        %v284 = vadd.f32 %v282, %v283
        %v285 = vrot.slane %v284, 1
        %v286 = vadd.f32 %v284, %v285
        %v287 = vmul.f32 %v286, %v278
        %vm288 = vcmp.eq.s32.totalorder %v269, 0
        %v289 = vsel %vm288, %v279, 0.0
        %v290 = vsel %vm288, %v287, 0.0
        %vm291 = vcmask 60448
        %v292 = vsel %vm291, %v265, 0.0
        %v293 = vrot.slane %v292, 4
        %v294 = vadd.f32 %v292, %v293
        %v295 = vrot.slane %v294, 2
        %v296 = vadd.f32 %v294, %v295
        %v297 = vrot.slane %v296, 1
        %v298 = vadd.f32 %v296, %v297
        %v299 = vmul.f32 %v298, %v278
        %v300 = vsel %vm291, %v266, 0.0
        %v301 = vrot.slane %v300, 4
        %v302 = vadd.f32 %v300, %v301
        %v303 = vrot.slane %v302, 2
        %v304 = vadd.f32 %v302, %v303
        %v305 = vrot.slane %v304, 1
        %v306 = vadd.f32 %v304, %v305
        %v307 = vmul.f32 %v306, %v278
        %vm308 = vcmp.eq.s32.totalorder %v269, 1
        %310 = vrot.lane.b32.xlu0 %v289, 4
        %v311 = vpop.permute.xlu0 %310
        %v313 = vsel %vm308, %v299, %v311
        %315 = vrot.lane.b32.xlu0 %v290, 4
        %v316 = vpop.permute.xlu0 %315
        %v318 = vsel %vm308, %v307, %v316
        %vm319 = vcmask 93248
        %v320 = vsel %vm319, %v265, 0.0
        %v321 = vrot.slane %v320, 4
        %v322 = vadd.f32 %v320, %v321
        %v323 = vrot.slane %v322, 2
        %v324 = vadd.f32 %v322, %v323
        %v325 = vrot.slane %v324, 1
        %v326 = vadd.f32 %v324, %v325
        %v327 = vmul.f32 %v326, %v278
        %v328 = vsel %vm319, %v266, 0.0
        %v329 = vrot.slane %v328, 4
        %v330 = vadd.f32 %v328, %v329
        %v331 = vrot.slane %v330, 2
        %v332 = vadd.f32 %v330, %v331
        %v333 = vrot.slane %v332, 1
        %v334 = vadd.f32 %v332, %v333
        %v335 = vmul.f32 %v334, %v278
        %vm336 = vcmp.eq.s32.totalorder %v269, 2
        %338 = vrot.lane.b32.xlu0 %v313, 4
        %v339 = vpop.permute.xlu0 %338
        %v341 = vsel %vm336, %v327, %v339
        %343 = vrot.lane.b32.xlu0 %v318, 4
        %v344 = vpop.permute.xlu0 %343
        %v346 = vsel %vm336, %v335, %v344
        %348 = vrot.lane.b32.xlu0 %v341, 120
        %v349 = vpop.permute.xlu0 %348
        %351 = vrot.lane.b32.xlu0 %v346, 120
        %v352 = vpop.permute.xlu0 %351
        %vm353 = vcmask 31744
        %v354 = vsel %vm353, %v349, 0
        %v356 = vsel %vm353, %v352, 0
        %358 = vmatprep.subr.mxu0 0.0
        %359 = vmatpush1.xpose.msra.mxu0 0.0
        %360 = vmatprep.subr.mxu0 0.0
        %361 = vmatpush1.xpose.msra.mxu0 0.0
        %362 = vmatprep.subr.mxu0 0.0
        %363 = vmatpush1.xpose.msra.mxu0 0.0
        %364 = vmatprep.subr.mxu0 0.0
        %365 = vmatpush1.xpose.msra.mxu0 0.0
        %366 = vmatprep.subr.mxu0 0.0
        %367 = vmatpush1.xpose.msra.mxu0 0.0
        %368 = vmatprep.subr.mxu0 0.0
        %369 = vmatpush1.xpose.msra.mxu0 0.0
        %370 = vmatprep.subr.mxu0 0.0
        %371 = vmatpush1.xpose.msra.mxu0 0.0
        %372 = vmatprep.subr.mxu0 0.0
        %373 = vmatpush1.xpose.msra.mxu0 0.0
        %374 = vmatprep.subr.mxu0 0.0
        %375 = vmatpush1.xpose.msra.mxu0 0.0
        %376 = vmatprep.subr.mxu0 0.0
        %377 = vmatpush1.xpose.msra.mxu0 0.0
        %378 = vmatprep.subr.mxu0 0.0
        %379 = vmatpush1.xpose.msra.mxu0 0.0
        %380 = vmatprep.subr.mxu0 0.0
        %381 = vmatpush1.xpose.msra.mxu0 0.0
        %382 = vmatprep.subr.mxu0 0.0
        %383 = vmatpush1.xpose.msra.mxu0 0.0
        %384 = vmatprep.subr.mxu0 0.0
        %385 = vmatpush1.xpose.msra.mxu0 0.0
        %386 = vmatprep.subr.mxu0 0.0
        %387 = vmatpush1.xpose.msra.mxu0 0.0
        %388 = vmatprep.subr.mxu0 0.0
        %389 = vmatpush1.xpose.msra.mxu0 %v356
        %390 = vmatprep.subr.mxu0 0.0
        %391 = vmatpush2.xpose.msra.mxu0 0.0
        %392 = vmatprep.subr.mxu0 0.0
        %393 = vmatpush2.xpose.msra.mxu0 0.0
        %394 = vmatprep.subr.mxu0 0.0
        %395 = vmatpush2.xpose.msra.mxu0 0.0
        %396 = vmatprep.subr.mxu0 0.0
        %397 = vmatpush2.xpose.msra.mxu0 0.0
        %398 = vmatprep.subr.mxu0 0.0
        %399 = vmatpush2.xpose.msra.mxu0 0.0
        %400 = vmatprep.subr.mxu0 0.0
        %401 = vmatpush2.xpose.msra.mxu0 0.0
        %402 = vmatprep.subr.mxu0 0.0
        %403 = vmatpush2.xpose.msra.mxu0 0.0
        %404 = vmatprep.subr.mxu0 0.0
        %405 = vmatpush2.xpose.msra.mxu0 0.0
        %406 = vmatprep.subr.mxu0 0.0
        %407 = vmatpush2.xpose.msra.mxu0 0.0
        %408 = vmatprep.subr.mxu0 0.0
        %409 = vmatpush2.xpose.msra.mxu0 0.0
        %410 = vmatprep.subr.mxu0 0.0
        %411 = vmatpush2.xpose.msra.mxu0 0.0
        %412 = vmatprep.subr.mxu0 0.0
        %413 = vmatpush2.xpose.msra.mxu0 0.0
        %414 = vmatprep.subr.mxu0 0.0
        %415 = vmatpush2.xpose.msra.mxu0 0.0
        %416 = vmatprep.subr.mxu0 0.0
        %417 = vmatpush2.xpose.msra.mxu0 0.0
        %418 = vmatprep.subr.mxu0 0.0
        %419 = vmatpush2.xpose.msra.mxu0 0.0
        %420 = vmatprep.subr.mxu0 0.0
        %421 = vmatpush2.xpose.msra.mxu0 0.0
        %422 = vmatprep.mubr.f32.mxu0 0.0
        %423 = vmatmul.mubr.f32.gmra.mxu0 %v354
        %v424 = vpop.f32.mrf.mxu0
        %v425 = vadd.f32 0.0, %v424
        %v426 = vpop.f32.mrf.mxu0
        %427 = vdwg.mxu0
        %v428 = vmul.f32 %v425, 0.5
        %v429 = vmax.f32 %v428, 0.0
        %v430 = vlog2.pop %v429
        %v431 = vmul.f32 %v430, 0.6931472
        %v432 = vld [vmem:[%s263] sm:$0x7]
        %v433 = vadd.f32 %v432, 1e-06
        %v434 = vlog2.pop %v433
        %v435 = vmul.f32 %v434, 0.6931472
        %v436 = vsub.f32 0.0, %v435
        %v437 = vadd.f32 %v436, 1e-06
        %v438 = vlog2.pop %v437
        %v439 = vmul.f32 %v438, 0.6931472
        %v440 = vsub.f32 0.0, %v439
        %v441 = vadd.f32 %v431, %v440
        %v442 = vmul.f32 %v441, 1.4285715
        %vm443 = vcmask 18432
        %v444 = vsel %vm443, %v442, -inf
        %445 = vmax.xlane.f32.xlu0 %v444
        %v446 = vpop.xlane.xlu0 %445
        %v447 = vsub.f32 %v442, %v446
        %v448 = vmul.f32 %v447, 1.442695
        %v449 = vpow.pop %v448
        %v450 = vsel %vm443, %v449, 0.0
        %451 = vadd.xlane.f32.xlu0 %v450
        %v452 = vpop.xlane.xlu0 %451
        %v453 = vlog2.pop %v452
        %v454 = vmul.f32 %v453, 0.6931472
        %v455 = vadd.f32 %v446, %v454
        %v456 = vsub.f32 %v442, %v455
        %v457 = vsel %vm443, %v456, -inf
        %v458 = vrot.slane %v457, 4
        %v459 = vmax.f32 %v457, %v458
        %v460 = vrot.slane %v459, 2
        %v461 = vmax.f32 %v459, %v460
        %v462 = vrot.slane %v461, 1
        %v463 = vmax.f32 %v461, %v462
        %v464 = vsub.f32 %v456, %v463
        %v465 = vmul.f32 %v464, 1.442695
        %v466 = vpow.pop %v465
        %v467 = vsel %vm443, %v466, 0.0
        %v468 = vrot.slane %v467, 4
        %v469 = vadd.f32 %v467, %v468
        %v470 = vrot.slane %v469, 2
        %v471 = vadd.f32 %v469, %v470
        %v472 = vrot.slane %v471, 1
        %v473 = vadd.f32 %v471, %v472
        %v474 = vlog2.pop %v473
        %v475 = vmul.f32 %v474, 0.6931472
        %v476 = vadd.f32 %v463, %v475
        %v477 = vsub.f32 %v456, %v476
        %v478 = vsel %vm443, %v477, -inf
        %479 = vmax.xlane.f32.xlu0 %v478
        %v480 = vpop.xlane.xlu0 %479
        %v481 = vsub.f32 %v477, %v480
        %v482 = vmul.f32 %v481, 1.442695
        %v483 = vpow.pop %v482
        %v484 = vsel %vm443, %v483, 0.0
        %485 = vadd.xlane.f32.xlu0 %v484
        %v486 = vpop.xlane.xlu0 %485
        %v487 = vlog2.pop %v486
        %v488 = vmul.f32 %v487, 0.6931472
        %v489 = vadd.f32 %v480, %v488
        %v490 = vsub.f32 %v477, %v489
        %v491 = vsel %vm443, %v490, -inf
        %v492 = vrot.slane %v491, 4
        %v493 = vmax.f32 %v491, %v492
        %v494 = vrot.slane %v493, 2
        %v495 = vmax.f32 %v493, %v494
        %v496 = vrot.slane %v495, 1
        %v497 = vmax.f32 %v495, %v496
        %v498 = vsub.f32 %v490, %v497
        %v499 = vmul.f32 %v498, 1.442695
        %v500 = vpow.pop %v499
        %v501 = vsel %vm443, %v500, 0.0
        %v502 = vrot.slane %v501, 4
        %v503 = vadd.f32 %v501, %v502
        %v504 = vrot.slane %v503, 2
        %v505 = vadd.f32 %v503, %v504
        %v506 = vrot.slane %v505, 1
        %v507 = vadd.f32 %v505, %v506
        %v508 = vlog2.pop %v507
        %v509 = vmul.f32 %v508, 0.6931472
        %v510 = vadd.f32 %v497, %v509
        %v511 = vsub.f32 %v490, %v510
        %v512 = vsel %vm443, %v511, -inf
        %513 = vmax.xlane.f32.xlu0 %v512
        %v514 = vpop.xlane.xlu0 %513
        %v515 = vsub.f32 %v511, %v514
        %v516 = vmul.f32 %v515, 1.442695
        %v517 = vpow.pop %v516
        %v518 = vsel %vm443, %v517, 0.0
        %519 = vadd.xlane.f32.xlu0 %v518
        %v520 = vpop.xlane.xlu0 %519
        %v521 = vlog2.pop %v520
        %v522 = vmul.f32 %v521, 0.6931472
        %v523 = vadd.f32 %v514, %v522
        %v524 = vsub.f32 %v511, %v523
        %v525 = vsel %vm443, %v524, -inf
        %v526 = vrot.slane %v525, 4
        %v527 = vmax.f32 %v525, %v526
        %v528 = vrot.slane %v527, 2
        %v529 = vmax.f32 %v527, %v528
        %v530 = vrot.slane %v529, 1
        %v531 = vmax.f32 %v529, %v530
        %v532 = vsub.f32 %v524, %v531
        %v533 = vmul.f32 %v532, 1.442695
        %v534 = vpow.pop %v533
        %v535 = vsel %vm443, %v534, 0.0
        %v536 = vrot.slane %v535, 4
        %v537 = vadd.f32 %v535, %v536
        %v538 = vrot.slane %v537, 2
        %v539 = vadd.f32 %v537, %v538
        %v540 = vrot.slane %v539, 1
        %v541 = vadd.f32 %v539, %v540
        %v542 = vlog2.pop %v541
        %v543 = vmul.f32 %v542, 0.6931472
        %v544 = vadd.f32 %v531, %v543
        %v545 = vsub.f32 %v524, %v544
        %v546 = vsel %vm443, %v545, -inf
        %547 = vmax.xlane.f32.xlu0 %v546
        %v548 = vpop.xlane.xlu0 %547
        %v549 = vsub.f32 %v545, %v548
        %v550 = vmul.f32 %v549, 1.442695
        %v551 = vpow.pop %v550
        %v552 = vsel %vm443, %v551, 0.0
        %553 = vadd.xlane.f32.xlu0 %v552
        %v554 = vpop.xlane.xlu0 %553
        %v555 = vlog2.pop %v554
        %v556 = vmul.f32 %v555, 0.6931472
        %v557 = vadd.f32 %v548, %v556
        %v558 = vsub.f32 %v545, %v557
        %v559 = vsel %vm443, %v558, -inf
        %v560 = vrot.slane %v559, 4
        %v561 = vmax.f32 %v559, %v560
        %v562 = vrot.slane %v561, 2
        %v563 = vmax.f32 %v561, %v562
        %v564 = vrot.slane %v563, 1
        %v565 = vmax.f32 %v563, %v564
        %v566 = vsub.f32 %v558, %v565
        %v567 = vmul.f32 %v566, 1.442695
        %v568 = vpow.pop %v567
        %v569 = vsel %vm443, %v568, 0.0
        %v570 = vrot.slane %v569, 4
        %v571 = vadd.f32 %v569, %v570
        %v572 = vrot.slane %v571, 2
        %v573 = vadd.f32 %v571, %v572
        %v574 = vrot.slane %v573, 1
        %v575 = vadd.f32 %v573, %v574
        %v576 = vlog2.pop %v575
        %v577 = vmul.f32 %v576, 0.6931472
        %v578 = vadd.f32 %v565, %v577
        %v579 = vsub.f32 %v558, %v578
        %v580 = vsel %vm443, %v579, -inf
        %581 = vmax.xlane.f32.xlu0 %v580
        %v582 = vpop.xlane.xlu0 %581
        %v583 = vsub.f32 %v579, %v582
        %v584 = vmul.f32 %v583, 1.442695
        %v585 = vpow.pop %v584
        %v586 = vsel %vm443, %v585, 0.0
        %587 = vadd.xlane.f32.xlu0 %v586
        %v588 = vpop.xlane.xlu0 %587
        %v589 = vlog2.pop %v588
        %v590 = vmul.f32 %v589, 0.6931472
        %v591 = vadd.f32 %v582, %v590
        %v592 = vsub.f32 %v579, %v591
        %v593 = vsel %vm443, %v592, -inf
        %v594 = vrot.slane %v593, 4
        %v595 = vmax.f32 %v593, %v594
        %v596 = vrot.slane %v595, 2
        %v597 = vmax.f32 %v595, %v596
        %v598 = vrot.slane %v597, 1
        %v599 = vmax.f32 %v597, %v598
        %v600 = vsub.f32 %v592, %v599
        %v601 = vmul.f32 %v600, 1.442695
        %v602 = vpow.pop %v601
        %v603 = vsel %vm443, %v602, 0.0
        %v604 = vrot.slane %v603, 4
        %v605 = vadd.f32 %v603, %v604
        %v606 = vrot.slane %v605, 2
        %v607 = vadd.f32 %v605, %v606
        %v608 = vrot.slane %v607, 1
        %v609 = vadd.f32 %v607, %v608
        %v610 = vlog2.pop %v609
        %v611 = vmul.f32 %v610, 0.6931472
        %v612 = vadd.f32 %v599, %v611
        %v613 = vsub.f32 %v592, %v612
        %v614 = vsel %vm443, %v613, -inf
        %615 = vmax.xlane.f32.xlu0 %v614
        %v616 = vpop.xlane.xlu0 %615
        %v617 = vsub.f32 %v613, %v616
        %v618 = vmul.f32 %v617, 1.442695
        %v619 = vpow.pop %v618
        %v620 = vsel %vm443, %v619, 0.0
        %621 = vadd.xlane.f32.xlu0 %v620
        %v622 = vpop.xlane.xlu0 %621
        %v623 = vlog2.pop %v622
        %v624 = vmul.f32 %v623, 0.6931472
        %v625 = vadd.f32 %v616, %v624
        %v626 = vsub.f32 %v613, %v625
        %v627 = vsel %vm443, %v626, -inf
        %v628 = vrot.slane %v627, 4
        %v629 = vmax.f32 %v627, %v628
        %v630 = vrot.slane %v629, 2
        %v631 = vmax.f32 %v629, %v630
        %v632 = vrot.slane %v631, 1
        %v633 = vmax.f32 %v631, %v632
        %v634 = vsub.f32 %v626, %v633
        %v635 = vmul.f32 %v634, 1.442695
        %v636 = vpow.pop %v635
        %v637 = vsel %vm443, %v636, 0.0
        %v638 = vrot.slane %v637, 4
        %v639 = vadd.f32 %v637, %v638
        %v640 = vrot.slane %v639, 2
        %v641 = vadd.f32 %v639, %v640
        %v642 = vrot.slane %v641, 1
        %v643 = vadd.f32 %v641, %v642
        %v644 = vlog2.pop %v643
        %v645 = vmul.f32 %v644, 0.6931472
        %v646 = vadd.f32 %v633, %v645
        %v647 = vsub.f32 %v626, %v646
        %v648 = vsel %vm443, %v647, -inf
        %649 = vmax.xlane.f32.xlu0 %v648
        %v650 = vpop.xlane.xlu0 %649
        %v651 = vsub.f32 %v647, %v650
        %v652 = vmul.f32 %v651, 1.442695
        %v653 = vpow.pop %v652
        %v654 = vsel %vm443, %v653, 0.0
        %655 = vadd.xlane.f32.xlu0 %v654
        %v656 = vpop.xlane.xlu0 %655
        %v657 = vlog2.pop %v656
        %v658 = vmul.f32 %v657, 0.6931472
        %v659 = vadd.f32 %v650, %v658
        %v660 = vsub.f32 %v647, %v659
        %v661 = vsel %vm443, %v660, -inf
        %v662 = vrot.slane %v661, 4
        %v663 = vmax.f32 %v661, %v662
        %v664 = vrot.slane %v663, 2
        %v665 = vmax.f32 %v663, %v664
        %v666 = vrot.slane %v665, 1
        %v667 = vmax.f32 %v665, %v666
        %v668 = vsub.f32 %v660, %v667
        %v669 = vmul.f32 %v668, 1.442695
        %v670 = vpow.pop %v669
        %v671 = vsel %vm443, %v670, 0.0
        %v672 = vrot.slane %v671, 4
        %v673 = vadd.f32 %v671, %v672
        %v674 = vrot.slane %v673, 2
        %v675 = vadd.f32 %v673, %v674
        %v676 = vrot.slane %v675, 1
        %v677 = vadd.f32 %v675, %v676
        %v678 = vlog2.pop %v677
        %v679 = vmul.f32 %v678, 0.6931472
        %v680 = vadd.f32 %v667, %v679
        %v681 = vsub.f32 %v660, %v680
        %v682 = vsel %vm443, %v681, -inf
        %683 = vmax.xlane.f32.xlu0 %v682
        %v684 = vpop.xlane.xlu0 %683
        %v685 = vsub.f32 %v681, %v684
        %v686 = vmul.f32 %v685, 1.442695
        %v687 = vpow.pop %v686
        %v688 = vsel %vm443, %v687, 0.0
        %689 = vadd.xlane.f32.xlu0 %v688
        %v690 = vpop.xlane.xlu0 %689
        %v691 = vlog2.pop %v690
        %v692 = vmul.f32 %v691, 0.6931472
        %v693 = vadd.f32 %v684, %v692
        %v694 = vsub.f32 %v681, %v693
        %v695 = vsel %vm443, %v694, -inf
        %v696 = vrot.slane %v695, 4
        %v697 = vmax.f32 %v695, %v696
        %v698 = vrot.slane %v697, 2
        %v699 = vmax.f32 %v697, %v698
        %v700 = vrot.slane %v699, 1
        %v701 = vmax.f32 %v699, %v700
        %v702 = vsub.f32 %v694, %v701
        %v703 = vmul.f32 %v702, 1.442695
        %v704 = vpow.pop %v703
        %v705 = vsel %vm443, %v704, 0.0
        %v706 = vrot.slane %v705, 4
        %v707 = vadd.f32 %v705, %v706
        %v708 = vrot.slane %v707, 2
        %v709 = vadd.f32 %v707, %v708
        %v710 = vrot.slane %v709, 1
        %v711 = vadd.f32 %v709, %v710
        %v712 = vlog2.pop %v711
        %v713 = vmul.f32 %v712, 0.6931472
        %v714 = vadd.f32 %v701, %v713
        %v715 = vsub.f32 %v694, %v714
        %v716 = vmul.f32 %v715, 1.442695
        %v717 = vpow.pop %v716
        %s719 = vtos %v717
        %v720 = vstv %s719
        %v722 = vmul.f32 %v266, %v720
        %v723 = vmul.f32 %v267, %v720
        %v724 = vrot.slane %v717, 1
        %s725 = vtos %v724
        %v726 = vstv %s725
        %v728 = vmul.f32 %v266, %v726
        %730 = vrot.lane.b32.xlu0 %v728, 124
        %v731 = vpop.permute.xlu0 %730
        %v733 = vadd.f32 %v722, %v731
        %v734 = vmul.f32 %v267, %v726
        %736 = vrot.lane.b32.xlu0 %v734, 124
        %v737 = vpop.permute.xlu0 %736
        %v739 = vadd.f32 %v723, %v737
        %v740 = vrot.slane %v717, 2
        %s741 = vtos %v740
        %v742 = vstv %s741
        %v744 = vmul.f32 %v266, %v742
        %746 = vrot.lane.b32.xlu0 %v744, 120
        %v747 = vpop.permute.xlu0 %746
        %v749 = vadd.f32 %v733, %v747
        %v750 = vmul.f32 %v267, %v742
        %752 = vrot.lane.b32.xlu0 %v750, 120
        %v753 = vpop.permute.xlu0 %752
        %v755 = vadd.f32 %v739, %v753
        %v756 = vpack.c.bf16 %v265, %v265
        %v757 = vpack.c.bf16 %v749, %v749
        %758 = vxpose.xlu0.c.b16.start [1/8] %v756, 128
        %759 = vxpose.xlu0.c.b16.cont [2/8] 0, 128
        %760 = vxpose.xlu0.c.b16.cont [3/8] 0, 128
        %761 = vxpose.xlu0.c.b16.cont [4/8] 0, 128
        %762 = vxpose.xlu0.c.b16.cont [5/8] 0, 128
        %763 = vxpose.xlu0.c.b16.cont [6/8] 0, 128
        %764 = vxpose.xlu0.c.b16.cont [7/8] 0, 128
        %765 = vxpose.xlu0.c.b16.end [8/8] 0, 128
        %v766 = vpop.trf.xlu0
        %v767 = vpop.trf.xlu0
        %v768 = vpop.trf.xlu0
        %v769 = vpop.trf.xlu0
        %v770 = vpop.trf.xlu0
        %v771 = vpop.trf.xlu0
        %v772 = vpop.trf.xlu0
        %v773 = vpop.trf.xlu0
        %v775 = vsel %vm353, %v766, 0
        %vm777 = vcmask 1041408
        %v779 = vsel %vm777, %v757, 0
        %781 = vmatprep.subr.bf16.mxu0 0
        %782 = vmatpush1.bf16.msra.mxu0 0
        %783 = vmatprep.subr.bf16.mxu0 0
        %784 = vmatpush1.bf16.msra.mxu0 0
        %785 = vmatprep.subr.bf16.mxu0 0
        %786 = vmatpush1.bf16.msra.mxu0 0
        %787 = vmatprep.subr.bf16.mxu0 0
        %788 = vmatpush1.bf16.msra.mxu0 0
        %789 = vmatprep.subr.bf16.mxu0 0
        %790 = vmatpush1.bf16.msra.mxu0 0
        %791 = vmatprep.subr.bf16.mxu0 0
        %792 = vmatpush1.bf16.msra.mxu0 0
        %793 = vmatprep.subr.bf16.mxu0 0
        %794 = vmatpush1.bf16.msra.mxu0 0
        %795 = vmatprep.subr.bf16.mxu0 0
        %796 = vmatpush1.bf16.msra.mxu0 %v779
        %797 = vmatprep.subr.bf16.mxu0 0
        %798 = vmatpush2.bf16.msra.mxu0 0
        %799 = vmatprep.subr.bf16.mxu0 0
        %800 = vmatpush2.bf16.msra.mxu0 0
        %801 = vmatprep.subr.bf16.mxu0 0
        %802 = vmatpush2.bf16.msra.mxu0 0
        %803 = vmatprep.subr.bf16.mxu0 0
        %804 = vmatpush2.bf16.msra.mxu0 0
        %805 = vmatprep.subr.bf16.mxu0 0
        %806 = vmatpush2.bf16.msra.mxu0 0
        %807 = vmatprep.subr.bf16.mxu0 0
        %808 = vmatpush2.bf16.msra.mxu0 0
        %809 = vmatprep.subr.bf16.mxu0 0
        %810 = vmatpush2.bf16.msra.mxu0 0
        %811 = vmatprep.subr.bf16.mxu0 0
        %812 = vmatpush2.bf16.msra.mxu0 0
        %813 = vmatprep.mubr.bf16.mxu0 0
        %814 = vmatmul.mubr.bf16.gmra.mxu0 %v775
        %v815 = vpop.f32.mrf.mxu0
        %v816 = vadd.f32 0.0, %v815
        %v817 = vpop.f32.mrf.mxu0
        %v818 = vpop.f32.mrf.mxu0
        %v819 = vpop.f32.mrf.mxu0
        %820 = vdwg.mxu0
        %v821 = vmul.f32 %v816, 1.4285715
        %v822 = vsel %vm270, %v821, -inf
        %823 = vmax.xlane.f32.xlu0 %v822
        %v824 = vpop.xlane.xlu0 %823
        %v825 = vsub.f32 %v821, %v824
        %v826 = vmul.f32 %v825, 1.442695
        %v827 = vpow.pop %v826
        %v828 = vsel %vm270, %v827, 0.0
        %829 = vadd.xlane.f32.xlu0 %v828
        %v830 = vpop.xlane.xlu0 %829
        %v831 = vrcp.pop %v830
        %v832 = vmul.f32 %v827, %v831
        %v833 = vpack.c.bf16 %v755, %v755
        %v834 = vpack.c.bf16 %v832, %v832
        %v836 = vsel %vm353, %v833, 0
        %v839 = vsel %vm353, %v834, 0
        %841 = vmatprep.subr.bf16.mxu0 0
        %842 = vmatpush1.bf16.xpose.msra.mxu0 0
        %843 = vmatprep.subr.bf16.mxu0 0
        %844 = vmatpush1.bf16.xpose.msra.mxu0 0
        %845 = vmatprep.subr.bf16.mxu0 0
        %846 = vmatpush1.bf16.xpose.msra.mxu0 0
        %847 = vmatprep.subr.bf16.mxu0 0
        %848 = vmatpush1.bf16.xpose.msra.mxu0 0
        %849 = vmatprep.subr.bf16.mxu0 0
        %850 = vmatpush1.bf16.xpose.msra.mxu0 0
        %851 = vmatprep.subr.bf16.mxu0 0
        %852 = vmatpush1.bf16.xpose.msra.mxu0 0
        %853 = vmatprep.subr.bf16.mxu0 0
        %854 = vmatpush1.bf16.xpose.msra.mxu0 0
        %855 = vmatprep.subr.bf16.mxu0 0
        %856 = vmatpush1.bf16.xpose.msra.mxu0 %v839
        %857 = vmatprep.subr.bf16.mxu0 0
        %858 = vmatpush2.bf16.xpose.msra.mxu0 0
        %859 = vmatprep.subr.bf16.mxu0 0
        %860 = vmatpush2.bf16.xpose.msra.mxu0 0
        %861 = vmatprep.subr.bf16.mxu0 0
        %862 = vmatpush2.bf16.xpose.msra.mxu0 0
        %863 = vmatprep.subr.bf16.mxu0 0
        %864 = vmatpush2.bf16.xpose.msra.mxu0 0
        %865 = vmatprep.subr.bf16.mxu0 0
        %866 = vmatpush2.bf16.xpose.msra.mxu0 0
        %867 = vmatprep.subr.bf16.mxu0 0
        %868 = vmatpush2.bf16.xpose.msra.mxu0 0
        %869 = vmatprep.subr.bf16.mxu0 0
        %870 = vmatpush2.bf16.xpose.msra.mxu0 0
        %871 = vmatprep.subr.bf16.mxu0 0
        %872 = vmatpush2.bf16.xpose.msra.mxu0 0
        %873 = vmatprep.mubr.bf16.mxu0 0
        %874 = vmatmul.mubr.bf16.gmra.mxu0 %v836
        %v875 = vpop.f32.mrf.mxu0
        %v876 = vadd.f32 0.0, %v875
        %v877 = vpop.f32.mrf.mxu0
        %v878 = vpop.f32.mrf.mxu0
        %v879 = vpop.f32.mrf.mxu0
        %880 = vdwg.mxu0
        %881 = vrot.lane.b32.xlu0 %v717, 127
        %v882 = vpop.permute.xlu0 %881
        %s883 = vtos %v882
        %v884 = vstv %s883
        %v886 = vmul.f32 %v266, %v884
        %v887 = vmul.f32 %v267, %v884
        %888 = vrot.lane.b32.xlu0 %v724, 127
        %v889 = vpop.permute.xlu0 %888
        %s890 = vtos %v889
        %v891 = vstv %s890
        %v893 = vmul.f32 %v266, %v891
        %895 = vrot.lane.b32.xlu0 %v893, 124
        %v896 = vpop.permute.xlu0 %895
        %v898 = vadd.f32 %v886, %v896
        %v899 = vmul.f32 %v267, %v891
        %901 = vrot.lane.b32.xlu0 %v899, 124
        %v902 = vpop.permute.xlu0 %901
        %v904 = vadd.f32 %v887, %v902
        %905 = vrot.lane.b32.xlu0 %v740, 127
        %v906 = vpop.permute.xlu0 %905
        %s907 = vtos %v906
        %v908 = vstv %s907
        %v910 = vmul.f32 %v266, %v908
        %912 = vrot.lane.b32.xlu0 %v910, 120
        %v913 = vpop.permute.xlu0 %912
        %v915 = vadd.f32 %v898, %v913
        %v916 = vmul.f32 %v267, %v908
        %918 = vrot.lane.b32.xlu0 %v916, 120
        %v919 = vpop.permute.xlu0 %918
        %v921 = vadd.f32 %v904, %v919
        %v922 = vpack.c.bf16 %v915, %v915
        %924 = vrot.lane.b32.xlu0 %v756, 124
        %v925 = vpop.permute.xlu0 %924
        %927 = vxpose.xlu0.c.b16.start [1/8] %v925, 128
        %928 = vxpose.xlu0.c.b16.cont [2/8] 0, 128
        %929 = vxpose.xlu0.c.b16.cont [3/8] 0, 128
        %930 = vxpose.xlu0.c.b16.cont [4/8] 0, 128
        %931 = vxpose.xlu0.c.b16.cont [5/8] 0, 128
        %932 = vxpose.xlu0.c.b16.cont [6/8] 0, 128
        %933 = vxpose.xlu0.c.b16.cont [7/8] 0, 128
        %934 = vxpose.xlu0.c.b16.end [8/8] 0, 128
        %v935 = vpop.trf.xlu0
        %v936 = vpop.trf.xlu0
        %v937 = vpop.trf.xlu0
        %v938 = vpop.trf.xlu0
        %v939 = vpop.trf.xlu0
        %v940 = vpop.trf.xlu0
        %v941 = vpop.trf.xlu0
        %v942 = vpop.trf.xlu0
        %v944 = vsel %vm353, %v935, 0
        %v947 = vsel %vm777, %v922, 0
        %949 = vmatprep.subr.bf16.mxu0 0
        %950 = vmatpush1.bf16.msra.mxu0 0
        %951 = vmatprep.subr.bf16.mxu0 0
        %952 = vmatpush1.bf16.msra.mxu0 0
        %953 = vmatprep.subr.bf16.mxu0 0
        %954 = vmatpush1.bf16.msra.mxu0 0
        %955 = vmatprep.subr.bf16.mxu0 0
        %956 = vmatpush1.bf16.msra.mxu0 0
        %957 = vmatprep.subr.bf16.mxu0 0
        %958 = vmatpush1.bf16.msra.mxu0 0
        %959 = vmatprep.subr.bf16.mxu0 0
        %960 = vmatpush1.bf16.msra.mxu0 0
        %961 = vmatprep.subr.bf16.mxu0 0
        %962 = vmatpush1.bf16.msra.mxu0 0
        %963 = vmatprep.subr.bf16.mxu0 0
        %964 = vmatpush1.bf16.msra.mxu0 %v947
        %965 = vmatprep.subr.bf16.mxu0 0
        %966 = vmatpush2.bf16.msra.mxu0 0
        %967 = vmatprep.subr.bf16.mxu0 0
        %968 = vmatpush2.bf16.msra.mxu0 0
        %969 = vmatprep.subr.bf16.mxu0 0
        %970 = vmatpush2.bf16.msra.mxu0 0
        %971 = vmatprep.subr.bf16.mxu0 0
        %972 = vmatpush2.bf16.msra.mxu0 0
        %973 = vmatprep.subr.bf16.mxu0 0
        %974 = vmatpush2.bf16.msra.mxu0 0
        %975 = vmatprep.subr.bf16.mxu0 0
        %976 = vmatpush2.bf16.msra.mxu0 0
        %977 = vmatprep.subr.bf16.mxu0 0
        %978 = vmatpush2.bf16.msra.mxu0 0
        %979 = vmatprep.subr.bf16.mxu0 0
        %980 = vmatpush2.bf16.msra.mxu0 0
        %981 = vmatprep.mubr.bf16.mxu0 0
        %982 = vmatmul.mubr.bf16.gmra.mxu0 %v944
        %v983 = vpop.f32.mrf.mxu0
        %v984 = vadd.f32 0.0, %v983
        %v985 = vpop.f32.mrf.mxu0
        %v986 = vpop.f32.mrf.mxu0
        %v987 = vpop.f32.mrf.mxu0
        %988 = vdwg.mxu0
        %v989 = vmul.f32 %v984, 1.4285715
        %v990 = vsel %vm270, %v989, -inf
        %991 = vmax.xlane.f32.xlu0 %v990
        %v992 = vpop.xlane.xlu0 %991
        %v993 = vsub.f32 %v989, %v992
        %v994 = vmul.f32 %v993, 1.442695
        %v995 = vpow.pop %v994
        %v996 = vsel %vm270, %v995, 0.0
        %997 = vadd.xlane.f32.xlu0 %v996
        %v998 = vpop.xlane.xlu0 %997
        %v999 = vrcp.pop %v998
        %v1000 = vmul.f32 %v995, %v999
        %v1001 = vpack.c.bf16 %v921, %v921
        %v1002 = vpack.c.bf16 %v1000, %v1000
        %v1004 = vsel %vm353, %v1001, 0
        %v1007 = vsel %vm353, %v1002, 0
        %1009 = vmatprep.subr.bf16.mxu0 0
        %1010 = vmatpush1.bf16.xpose.msra.mxu0 0
        %1011 = vmatprep.subr.bf16.mxu0 0
        %1012 = vmatpush1.bf16.xpose.msra.mxu0 0
        %1013 = vmatprep.subr.bf16.mxu0 0
        %1014 = vmatpush1.bf16.xpose.msra.mxu0 0
        %1015 = vmatprep.subr.bf16.mxu0 0
        %1016 = vmatpush1.bf16.xpose.msra.mxu0 0
        %1017 = vmatprep.subr.bf16.mxu0 0
        %1018 = vmatpush1.bf16.xpose.msra.mxu0 0
        %1019 = vmatprep.subr.bf16.mxu0 0
        %1020 = vmatpush1.bf16.xpose.msra.mxu0 0
        %1021 = vmatprep.subr.bf16.mxu0 0
        %1022 = vmatpush1.bf16.xpose.msra.mxu0 0
        %1023 = vmatprep.subr.bf16.mxu0 0
        %1024 = vmatpush1.bf16.xpose.msra.mxu0 %v1007
        %1025 = vmatprep.subr.bf16.mxu0 0
        %1026 = vmatpush2.bf16.xpose.msra.mxu0 0
        %1027 = vmatprep.subr.bf16.mxu0 0
        %1028 = vmatpush2.bf16.xpose.msra.mxu0 0
        %1029 = vmatprep.subr.bf16.mxu0 0
        %1030 = vmatpush2.bf16.xpose.msra.mxu0 0
        %1031 = vmatprep.subr.bf16.mxu0 0
        %1032 = vmatpush2.bf16.xpose.msra.mxu0 0
        %1033 = vmatprep.subr.bf16.mxu0 0
        %1034 = vmatpush2.bf16.xpose.msra.mxu0 0
        %1035 = vmatprep.subr.bf16.mxu0 0
        %1036 = vmatpush2.bf16.xpose.msra.mxu0 0
        %1037 = vmatprep.subr.bf16.mxu0 0
        %1038 = vmatpush2.bf16.xpose.msra.mxu0 0
        %1039 = vmatprep.subr.bf16.mxu0 0
        %1040 = vmatpush2.bf16.xpose.msra.mxu0 0
        %1041 = vmatprep.mubr.bf16.mxu0 0
        %1042 = vmatmul.mubr.bf16.gmra.mxu0 %v1004
        %v1043 = vpop.f32.mrf.mxu0
        %v1044 = vadd.f32 0.0, %v1043
        %v1045 = vpop.f32.mrf.mxu0
        %v1046 = vpop.f32.mrf.mxu0
        %v1047 = vpop.f32.mrf.mxu0
        %1048 = vdwg.mxu0
        %1049 = vrot.lane.b32.xlu0 %v717, 126
        %v1050 = vpop.permute.xlu0 %1049
        %s1051 = vtos %v1050
        %v1052 = vstv %s1051
        %v1054 = vmul.f32 %v266, %v1052
        %v1055 = vmul.f32 %v267, %v1052
        %1056 = vrot.lane.b32.xlu0 %v724, 126
        %v1057 = vpop.permute.xlu0 %1056
        %s1058 = vtos %v1057
        %v1059 = vstv %s1058
        %v1061 = vmul.f32 %v266, %v1059
        %1063 = vrot.lane.b32.xlu0 %v1061, 124
        %v1064 = vpop.permute.xlu0 %1063
        %v1066 = vadd.f32 %v1054, %v1064
        %v1067 = vmul.f32 %v267, %v1059
        %1069 = vrot.lane.b32.xlu0 %v1067, 124
        %v1070 = vpop.permute.xlu0 %1069
        %v1072 = vadd.f32 %v1055, %v1070
        %1073 = vrot.lane.b32.xlu0 %v740, 126
        %v1074 = vpop.permute.xlu0 %1073
        %s1075 = vtos %v1074
        %v1076 = vstv %s1075
        %v1078 = vmul.f32 %v266, %v1076
        %1080 = vrot.lane.b32.xlu0 %v1078, 120
        %v1081 = vpop.permute.xlu0 %1080
        %v1083 = vadd.f32 %v1066, %v1081
        %v1084 = vmul.f32 %v267, %v1076
        %1086 = vrot.lane.b32.xlu0 %v1084, 120
        %v1087 = vpop.permute.xlu0 %1086
        %v1089 = vadd.f32 %v1072, %v1087
        %v1090 = vpack.c.bf16 %v1083, %v1083
        %1091 = vrot.lane.b32.xlu0 %v756, 120
        %v1092 = vpop.permute.xlu0 %1091
        %1094 = vxpose.xlu0.c.b16.start [1/8] %v1092, 128
        %1095 = vxpose.xlu0.c.b16.cont [2/8] 0, 128
        %1096 = vxpose.xlu0.c.b16.cont [3/8] 0, 128
        %1097 = vxpose.xlu0.c.b16.cont [4/8] 0, 128
        %1098 = vxpose.xlu0.c.b16.cont [5/8] 0, 128
        %1099 = vxpose.xlu0.c.b16.cont [6/8] 0, 128
        %1100 = vxpose.xlu0.c.b16.cont [7/8] 0, 128
        %1101 = vxpose.xlu0.c.b16.end [8/8] 0, 128
        %v1102 = vpop.trf.xlu0
        %v1103 = vpop.trf.xlu0
        %v1104 = vpop.trf.xlu0
        %v1105 = vpop.trf.xlu0
        %v1106 = vpop.trf.xlu0
        %v1107 = vpop.trf.xlu0
        %v1108 = vpop.trf.xlu0
        %v1109 = vpop.trf.xlu0
        %v1111 = vsel %vm353, %v1102, 0
        %v1114 = vsel %vm777, %v1090, 0
        %1116 = vmatprep.subr.bf16.mxu0 0
        %1117 = vmatpush1.bf16.msra.mxu0 0
        %1118 = vmatprep.subr.bf16.mxu0 0
        %1119 = vmatpush1.bf16.msra.mxu0 0
        %1120 = vmatprep.subr.bf16.mxu0 0
        %1121 = vmatpush1.bf16.msra.mxu0 0
        %1122 = vmatprep.subr.bf16.mxu0 0
        %1123 = vmatpush1.bf16.msra.mxu0 0
        %1124 = vmatprep.subr.bf16.mxu0 0
        %1125 = vmatpush1.bf16.msra.mxu0 0
        %1126 = vmatprep.subr.bf16.mxu0 0
        %1127 = vmatpush1.bf16.msra.mxu0 0
        %1128 = vmatprep.subr.bf16.mxu0 0
        %1129 = vmatpush1.bf16.msra.mxu0 0
        %1130 = vmatprep.subr.bf16.mxu0 0
        %1131 = vmatpush1.bf16.msra.mxu0 %v1114
        %1132 = vmatprep.subr.bf16.mxu0 0
        %1133 = vmatpush2.bf16.msra.mxu0 0
        %1134 = vmatprep.subr.bf16.mxu0 0
        %1135 = vmatpush2.bf16.msra.mxu0 0
        %1136 = vmatprep.subr.bf16.mxu0 0
        %1137 = vmatpush2.bf16.msra.mxu0 0
        %1138 = vmatprep.subr.bf16.mxu0 0
        %1139 = vmatpush2.bf16.msra.mxu0 0
        %1140 = vmatprep.subr.bf16.mxu0 0
        %1141 = vmatpush2.bf16.msra.mxu0 0
        %1142 = vmatprep.subr.bf16.mxu0 0
        %1143 = vmatpush2.bf16.msra.mxu0 0
        %1144 = vmatprep.subr.bf16.mxu0 0
        %1145 = vmatpush2.bf16.msra.mxu0 0
        %1146 = vmatprep.subr.bf16.mxu0 0
        %1147 = vmatpush2.bf16.msra.mxu0 0
        %1148 = vmatprep.mubr.bf16.mxu0 0
        %1149 = vmatmul.mubr.bf16.gmra.mxu0 %v1111
        %v1150 = vpop.f32.mrf.mxu0
        %v1151 = vadd.f32 0.0, %v1150
        %v1152 = vpop.f32.mrf.mxu0
        %v1153 = vpop.f32.mrf.mxu0
        %v1154 = vpop.f32.mrf.mxu0
        %1155 = vdwg.mxu0
        %v1156 = vmul.f32 %v1151, 1.4285715
        %v1157 = vsel %vm270, %v1156, -inf
        %1158 = vmax.xlane.f32.xlu0 %v1157
        %v1159 = vpop.xlane.xlu0 %1158
        %v1160 = vsub.f32 %v1156, %v1159
        %v1161 = vmul.f32 %v1160, 1.442695
        %v1162 = vpow.pop %v1161
        %v1163 = vsel %vm270, %v1162, 0.0
        %1164 = vadd.xlane.f32.xlu0 %v1163
        %v1165 = vpop.xlane.xlu0 %1164
        %v1166 = vrcp.pop %v1165
        %v1167 = vmul.f32 %v1162, %v1166
        %v1168 = vpack.c.bf16 %v1089, %v1089
        %v1169 = vpack.c.bf16 %v1167, %v1167
        %v1171 = vsel %vm353, %v1168, 0
        %v1174 = vsel %vm353, %v1169, 0
        %1176 = vmatprep.subr.bf16.mxu0 0
        %1177 = vmatpush1.bf16.xpose.msra.mxu0 0
        %1178 = vmatprep.subr.bf16.mxu0 0
        %1179 = vmatpush1.bf16.xpose.msra.mxu0 0
        %1180 = vmatprep.subr.bf16.mxu0 0
        %1181 = vmatpush1.bf16.xpose.msra.mxu0 0
        %1182 = vmatprep.subr.bf16.mxu0 0
        %1183 = vmatpush1.bf16.xpose.msra.mxu0 0
        %1184 = vmatprep.subr.bf16.mxu0 0
        %1185 = vmatpush1.bf16.xpose.msra.mxu0 0
        %1186 = vmatprep.subr.bf16.mxu0 0
        %1187 = vmatpush1.bf16.xpose.msra.mxu0 0
        %1188 = vmatprep.subr.bf16.mxu0 0
        %1189 = vmatpush1.bf16.xpose.msra.mxu0 0
        %1190 = vmatprep.subr.bf16.mxu0 0
        %1191 = vmatpush1.bf16.xpose.msra.mxu0 %v1174
        %1192 = vmatprep.subr.bf16.mxu0 0
        %1193 = vmatpush2.bf16.xpose.msra.mxu0 0
        %1194 = vmatprep.subr.bf16.mxu0 0
        %1195 = vmatpush2.bf16.xpose.msra.mxu0 0
        %1196 = vmatprep.subr.bf16.mxu0 0
        %1197 = vmatpush2.bf16.xpose.msra.mxu0 0
        %1198 = vmatprep.subr.bf16.mxu0 0
        %1199 = vmatpush2.bf16.xpose.msra.mxu0 0
        %1200 = vmatprep.subr.bf16.mxu0 0
        %1201 = vmatpush2.bf16.xpose.msra.mxu0 0
        %1202 = vmatprep.subr.bf16.mxu0 0
        %1203 = vmatpush2.bf16.xpose.msra.mxu0 0
        %1204 = vmatprep.subr.bf16.mxu0 0
        %1205 = vmatpush2.bf16.xpose.msra.mxu0 0
        %1206 = vmatprep.subr.bf16.mxu0 0
        %1207 = vmatpush2.bf16.xpose.msra.mxu0 0
        %1208 = vmatprep.mubr.bf16.mxu0 0
        %1209 = vmatmul.mubr.bf16.gmra.mxu0 %v1171
        %v1210 = vpop.f32.mrf.mxu0
        %v1211 = vadd.f32 0.0, %v1210
        %v1212 = vpop.f32.mrf.mxu0
        %v1213 = vpop.f32.mrf.mxu0
        %v1214 = vpop.f32.mrf.mxu0
        %1215 = vdwg.mxu0
        %v1216 = vmul.f32 %v876, %v720
        %v1217 = vmul.f32 %v1044, %v884
        %v1218 = vadd.f32 %v1216, %v1217
        %v1219 = vmul.f32 %v1211, %v1052
        %v1220 = vadd.f32 %v1218, %v1219
        %1221 = vst.msk [vmem:[%s251] sm:$0xf] %vm270, %v1220
        %v1222 = vmul.f32 %v876, %v726
        %v1223 = vmul.f32 %v1044, %v891
        %v1224 = vadd.f32 %v1222, %v1223
        %v1225 = vmul.f32 %v1211, %v1059
        %v1226 = vadd.f32 %v1224, %v1225
        %1228 = vrot.lane.b32.xlu0 %v1226, 4
        %v1229 = vpop.permute.xlu0 %1228
        %1231 = vst.msk [vmem:[%s251] sm:$0xf] %vm291, %v1229
        %v1232 = vmul.f32 %v876, %v742
        %v1233 = vmul.f32 %v1044, %v908
        %v1234 = vadd.f32 %v1232, %v1233
        %v1235 = vmul.f32 %v1211, %v1076
        %v1236 = vadd.f32 %v1234, %v1235
        %1238 = vrot.lane.b32.xlu0 %v1236, 8
        %v1239 = vpop.permute.xlu0 %1238
        %1241 = vst.msk [vmem:[%s251] sm:$0xf] %vm319, %v1239
        %v1242 = vld [vmem:[%s259] sm:$0xf]
        %vm1243 = vcmask 126048
        %1244 = vst.msk [vmem:[%s251] sm:$0xf] %vm1243, %v1242
        %s1245 = sand.u32 %s133, 1
        %s1246 = scalar_lea.sflag [#allocation4], %s1245
        %s1247 = sand.u32 %s133, 1
        %s1248 = smul.addr %s1247, 4
        %s1249 = scalar_lea.vmem [#allocation5], %s1248
        // Predicated region
        $region41: #{tpu_custom_call.1} parent=35 // pred_check
          %p1250 = pneg %p143
        $region42: #{tpu_custom_call.1} parent=35 // pred_check_branch
          %1252 = sbr.rel (%p1250) target = $region44
        $region43: #{tpu_custom_call.1} parent=35 // pred_region
          %s1254 = ssub.s32 64, 64
          %1255 = vsyncadd %s1246, %s1254
          %s1256 = smul.addr %s21, 64
          %s1257 = scalar_lea.hbm %s4, %s1256
          %s1259 = sshll.u32 %s1249, 4
          %s1260 = int_to_ptr.vmem [resolvable:$true] %s1259
          %1262 = dma.vmem_to_hbm [thread:$0]  %s1260, 64, %s1257, %s1246
        $region44: #{tpu_custom_call.1} parent=35 // pred_fallthru
          _
      $region36: #{tpu_custom_call.1} parent=5 // pred_fallthru
        _
      %p1263 = scmp.le.s32.totalorder 2, %s16
      // Predicated region
      $region45: #{tpu_custom_call.1} parent=5 // pred_check
        %p1264 = pneg %p1263
      $region46: #{tpu_custom_call.1} parent=5 // pred_check_branch
        %1266 = sbr.rel (%p1264) target = $region48
      $region47: #{tpu_custom_call.1} parent=5 // pred_region
        %s1267 = ssub.s32 %s16, 2
        // Predicated region
        $region49: #{tpu_custom_call.1} parent=47 // pred_check
          %p1268 = pneg %p149
        $region50: #{tpu_custom_call.1} parent=47 // pred_check_branch
          %1270 = sbr.rel (%p1268) target = $region52
        $region51: #{tpu_custom_call.1} parent=47 // pred_region
          %s1271 = sand.u32 %s134, 1
          %s1272 = scalar_lea.sflag [#allocation4], %s1271
          %s1273 = sand.u32 %s134, 1
          %s1274 = smul.addr %s1273, 4
          %s1275 = scalar_lea.vmem [#allocation5], %s1274
          %1276 = dma.done %s1272, 64
        $region52: #{tpu_custom_call.1} parent=47 // pred_fallthru
          _
      $region48: #{tpu_custom_call.1} parent=5 // pred_fallthru
        _
    $region6: #{tpu_custom_call.1} parent=1 // loop_footer
      %s20 = sadd.s32 1, %s16
    $region7: #{tpu_custom_call.1} parent=1 // loop_footer_branch
      %15 = sbr.rel target = $region3
    $region8: #{tpu_custom_call.1} parent=1 // loop_exit
      _
    %1277 = vsyncpa [#allocation3], 1
    %s1278 = scalar_lea.sflag [#allocation3], 1
    %1279 = vsyncpa %s1278, 1
    %1280 = vsyncpa [#allocation4], 1
    %s1281 = scalar_lea.sflag [#allocation4], 1
    %1282 = vsyncpa %s1281, 1

</llo_original>
